<compile_context>
chip_gen: v6e
topology: v6e:2x2x1
jax: 0.10.0
libtpu: 0.0.40
codegen_flags: <defaults>
</compile_context>

<pallas_src>
import math
import jax
import jax.numpy as jnp
from jax.experimental import pallas as pl
from jax.experimental.pallas import tpu as pltpu


def autopad(k, p=None, d=1):
    """Pad to 'same' shape outputs (mirrors the PyTorch helper)."""
    if d > 1:
        k = d * (k - 1) + 1 if isinstance(k, int) else [d * (x - 1) + 1 for x in k]
    if p is None:
        p = k // 2 if isinstance(k, int) else [x // 2 for x in k]
    return p


def _round_up(x, m):
    return ((x + m - 1) // m) * m


def _pick_row_block(Ho, Wo, target_rows=512):
    """Largest divisor of Ho whose output-row count Ho_t*Wo stays <= target."""
    best = 1
    for t in range(1, Ho + 1):
        if Ho % t == 0 and t * Wo <= max(target_rows, Wo):
            best = t
    return best


# ----------------------------- Pallas kernel --------------------------------
def _make_kernel(k, s, d, Ho_t, Wo, C1p):
    """Fused conv (single deep matmul over folded taps) + folded-BN + SiLU."""
    KC = k * k * C1p

    def kernel(x_ref, w_ref, bn_ref, o_ref, lhs_ref):
        # x_ref:   (1, Hp, Wp, C1p)    whole zero-padded NHWC image (bf16),
        #                              resident across the row-block grid axis
        # w_ref:   (KC, C2p)           im2col-folded conv weight (bf16), resident
        # bn_ref:  (2, C2p)            row 0 = BN scale, row 1 = BN shift (f32)
        # o_ref:   (1, Ho_t, Wo, C2p)  bf16 output row-block (lane-dense)
        # lhs_ref: (Ho_t, Wo, KC)      bf16 VMEM scratch: im2col LHS for this block
        r = pl.program_id(1)
        row0 = r * (Ho_t * s)

        # Build the im2col LHS once in VMEM scratch (taps ordered (kh, kw, c1)).
        for kh in range(k):
            for kw in range(k):
                tap = kh * k + kw
                if s == 1:
                    slab = x_ref[0, pl.ds(row0 + kh * d, Ho_t),
                                 kw * d:kw * d + Wo, :]
                else:
                    # TODO(synk): stride > 1 path is not exercised by the demo and
                    #             is unvalidated against the XLA reference.
                    wide = x_ref[0, pl.ds(row0 + kh * d, (Ho_t - 1) * s + 1),
                                 kw * d:kw * d + (Wo - 1) * s + 1, :]
                    slab = wide[::s, ::s, :]
                lhs_ref[:, :, tap * C1p:(tap + 1) * C1p] = slab

        c2p = o_ref.shape[-1]
        lhs = lhs_ref[...].reshape(Ho_t * Wo, KC)
        # Single deep MXU contraction (K = k*k*C1p), f32 accumulation.
        acc = jnp.dot(lhs, w_ref[...], preferred_element_type=jnp.float32)

        # Folded BatchNorm (inference) + SiLU in f32; exp & reciprocal -> EUP slot.
        y = acc * bn_ref[0:1, :] + bn_ref[1:2, :]
        y = y * pl.reciprocal(1.0 + jnp.exp(-y), approx=True)
        o_ref[0] = y.reshape(Ho_t, Wo, c2p).astype(o_ref.dtype)

    return kernel


# ------------------------------- wrapper -------------------------------------
def conv_bn_silu(x, weight, gamma, beta, running_mean, running_var,
                 k=3, s=1, p=None, d=1, g=1, eps=1e-5,
                 row_block=None, compute_dtype=jnp.bfloat16):
    """
    x:      (N, C1, H, W)   float32, NCHW (PyTorch convention)
    weight: (C2, C1, k, k)  conv weight (bias=False)
    returns (N, C2, Ho, Wo) float32
    """
    if g != 1:
        # TODO(synk): grouped convolution (g > 1) not supported.
        raise NotImplementedError("grouped conv (g > 1) not supported")

    p = autopad(k, p, d)
    N, C1, H, W = x.shape
    C2 = weight.shape[0]
    Ho = (H + 2 * p - d * (k - 1) - 1) // s + 1
    Wo = (W + 2 * p - d * (k - 1) - 1) // s + 1
    Hp, Wp = H + 2 * p, W + 2 * p

    C1p = _round_up(C1, 8)      # sublane-align the per-tap channel slice
    C2p = _round_up(C2, 128)    # lane-dense output channels
    KC = k * k * C1p            # folded contraction depth

    Ho_t = row_block if row_block is not None else _pick_row_block(Ho, Wo)
    assert Ho % Ho_t == 0, (Ho, Ho_t)
    R = Ho // Ho_t

    # NHWC + single zero-pad (spatial halo + channel padding), cast to bf16.
    x_nhwc = jnp.transpose(x, (0, 2, 3, 1)).astype(compute_dtype)
    xp = jnp.pad(x_nhwc, ((0, 0), (p, p), (p, p), (0, C1p - C1)))

    # (C2, C1, k, k) -> (k, k, C1p, C2p) -> (k*k*C1p, C2p); contraction order
    # (kh, kw, c1) matches the LHS built inside the kernel.
    w_im2col = jnp.transpose(weight, (2, 3, 1, 0))
    w_im2col = jnp.pad(w_im2col, ((0, 0), (0, 0), (0, C1p - C1), (0, C2p - C2)))
    w_im2col = w_im2col.reshape(KC, C2p).astype(compute_dtype)

    # Folded BatchNorm (inference): y = conv * scale + shift, packed -> one DMA.
    scale = gamma / jnp.sqrt(running_var + eps)
    shift = beta - running_mean * scale
    bn = jnp.pad(jnp.stack([scale, shift], axis=0).astype(jnp.float32),
                 ((0, 0), (0, C2p - C2)))

    out_dtype = jnp.bfloat16
    flops = 2 * N * Ho * Wo * KC * C2p
    bytes_accessed = (xp.size * 2 + w_im2col.size * 2 + bn.size * 4
                      + N * Ho * Wo * C2p * 2)

    # Per-step VMEM estimate; raise the scoped limit only when needed (cap at
    # v7x's 64 MiB physical VMEM).
    in_tile_b = Hp * Wp * C1p * 2
    out_tile_b = Ho_t * Wo * C2p * 2
    lhs_b = Ho_t * Wo * KC * 2
    vmem_needed = (2 * (in_tile_b + out_tile_b) + w_im2col.size * 2
                   + bn.size * 4 + lhs_b + (2 << 20))
    cp_kwargs = dict(dimension_semantics=("parallel", "parallel"))
    if vmem_needed > (16 << 20):
        cp_kwargs["vmem_limit_bytes"] = int(min(vmem_needed, 64 << 20))

    kernel = _make_kernel(k, s, d, Ho_t, Wo, C1p)
    out_p = pl.pallas_call(
        kernel,
        out_shape=jax.ShapeDtypeStruct((N, Ho, Wo, C2p), out_dtype),
        grid_spec=pltpu.PrefetchScalarGridSpec(
            num_scalar_prefetch=0,
            grid=(N, R),
            in_specs=[
                # whole padded image; changes only with n -> resident across r
                pl.BlockSpec((1, Hp, Wp, C1p), lambda n, r: (n, 0, 0, 0)),
                # weight / BN: constant index_map -> resident across whole grid
                pl.BlockSpec((KC, C2p), lambda n, r: (0, 0)),
                pl.BlockSpec((2, C2p), lambda n, r: (0, 0)),
            ],
            out_specs=pl.BlockSpec((1, Ho_t, Wo, C2p), lambda n, r: (n, r, 0, 0)),
            scratch_shapes=[pltpu.VMEM((Ho_t, Wo, KC), compute_dtype)],
        ),
        compiler_params=pltpu.CompilerParams(**cp_kwargs),
        cost_estimate=pl.CostEstimate(
            flops=flops,
            transcendentals=N * Ho * Wo * C2p,
            bytes_accessed=bytes_accessed),
    )(xp, w_im2col, bn)

    out = out_p[:, :, :, :C2].astype(jnp.float32)
    # Back to PyTorch's NCHW (dropped entirely in an NHWC-chained deployment).
    return jnp.transpose(out, (0, 3, 1, 2))


# ------------------------------- reference ----------------------------------
def _reference(x, weight, gamma, beta, running_mean, running_var,
               k=3, s=1, p=None, d=1, eps=1e-5, compute_dtype=jnp.bfloat16):
    """XLA reference using the same bf16 operands + f32 accumulation."""
    p = autopad(k, p, d)
    y = jax.lax.conv_general_dilated(
        x.astype(compute_dtype), weight.astype(compute_dtype),
        window_strides=(s, s), padding=[(p, p), (p, p)],
        rhs_dilation=(d, d),
        dimension_numbers=("NCHW", "OIHW", "NCHW"),
        preferred_element_type=jnp.float32)
    scale = gamma / jnp.sqrt(running_var + eps)
    shift = beta - running_mean * scale
    z = y * scale.reshape(1, -1, 1, 1) + shift.reshape(1, -1, 1, 1)
    return z * jax.nn.sigmoid(z)


# --------------------------------- main --------------------------------------
if __name__ == "__main__":
    key = jax.random.PRNGKey(0)
    kx, kw_, kg, kb, km, kv = jax.random.split(key, 6)

    # Conv(c1=4, c2=8, k=3, s=1) on a (2, 4, 16, 16) input.
    N, C1, H, W = 2, 4, 16, 16
    C2, K, S, D = 8, 3, 1, 1

    x = jax.random.normal(kx, (N, C1, H, W), jnp.float32)
    fan_in = C1 * K * K
    bound = 1.0 / math.sqrt(fan_in)
    weight = jax.random.uniform(kw_, (C2, C1, K, K), jnp.float32, -bound, bound)
    gamma = jax.random.uniform(kg, (C2,), jnp.float32, 0.5, 1.5)
    beta = jax.random.normal(kb, (C2,), jnp.float32) * 0.1
    running_mean = jax.random.normal(km, (C2,), jnp.float32) * 0.1
    running_var = jax.random.uniform(kv, (C2,), jnp.float32, 0.5, 1.5)

    ref = _reference(x, weight, gamma, beta, running_mean, running_var,
                     k=K, s=S, d=D)

    # Row-tiled path: 2 row-blocks per image (exercises the spatial grid axis
    # with the input image held resident across row-blocks).
    out_tiled = conv_bn_silu(x, weight, gamma, beta, running_mean, running_var,
                             k=K, s=S, d=D, row_block=8)
    out_tiled = jax.block_until_ready(out_tiled)
    assert out_tiled.shape == (N, C2, H, W), out_tiled.shape
    err_t = float(jnp.max(jnp.abs(out_tiled - ref)))
    assert jnp.allclose(out_tiled, ref, atol=2e-2, rtol=2e-2), err_t

    # Auto-picked row block (whole image per grid step at this toy size).
    out_auto = conv_bn_silu(x, weight, gamma, beta, running_mean, running_var,
                            k=K, s=S, d=D)
    out_auto = jax.block_until_ready(out_auto)
    err_a = float(jnp.max(jnp.abs(out_auto - ref)))
    assert jnp.allclose(out_auto, ref, atol=2e-2, rtol=2e-2), err_a

    print("KERNEL_OK")
</pallas_src>

<mosaic_0001>
module attributes {stable_mosaic.version = 11 : i64} {
  func.func @kernel(%arg0: i32, %arg1: i32, %arg2: memref<1x18x18x8xbf16, #tpu.memory_space<vmem>>, %arg3: memref<72x128xbf16, #tpu.memory_space<vmem>>, %arg4: memref<2x128xf32, #tpu.memory_space<vmem>>, %arg5: memref<1x8x16x128xbf16, #tpu.memory_space<vmem>>, %arg6: memref<8x16x72xbf16, #tpu.memory_space<vmem>>) attributes {dimension_semantics = [#tpu.dimension_semantics<parallel>, #tpu.dimension_semantics<parallel>], iteration_bounds = array<i64: 2, 2>, scalar_prefetch = 0 : i64, scratch_operands = 1 : i64, tpu.core_type = #tpu.core_type<tc>, window_params = [{transform_indices = @transform_0, window_bounds = array<i64: 1, 18, 18, 8>}, {pipeline_mode = #tpu.pipeline_mode<synchronous>, transform_indices = @transform_1, window_bounds = array<i64: 72, 128>}, {pipeline_mode = #tpu.pipeline_mode<synchronous>, transform_indices = @transform_2, window_bounds = array<i64: 2, 128>}, {transform_indices = @transform_3, window_bounds = array<i64: 1, 8, 16, 128>}]} {
    %c8_i32 = arith.constant 8 : i32
    %0 = arith.muli %arg1, %c8_i32 : i32
    %c0_i32 = arith.constant 0 : i32
    %1 = arith.addi %0, %c0_i32 : i32
    %c0 = arith.constant 0 : index
    %2 = arith.index_cast %1 : i32 to index
    %c0_0 = arith.constant 0 : index
    %c0_1 = arith.constant 0 : index
    %3 = vector.load %arg2[%c0, %2, %c0_0, %c0_1] : memref<1x18x18x8xbf16, #tpu.memory_space<vmem>>, vector<1x8x16x8xbf16>
    %4 = vector.shape_cast %3 : vector<1x8x16x8xbf16> to vector<8x16x8xbf16>
    %c0_2 = arith.constant 0 : index
    %c0_3 = arith.constant 0 : index
    %c0_4 = arith.constant 0 : index
    %5 = vector.load %arg6[%c0_2, %c0_3, %c0_4] : memref<8x16x72xbf16, #tpu.memory_space<vmem>>, vector<8x16x8xbf16>
    tpu.vector_store %arg6[%c0_2, %c0_3, %c0_4], %4 {strides = array<i32>} : memref<8x16x72xbf16, #tpu.memory_space<vmem>>, vector<8x16x8xbf16>,
    %c0_i32_5 = arith.constant 0 : i32
    %6 = arith.addi %0, %c0_i32_5 : i32
    %c0_6 = arith.constant 0 : index
    %7 = arith.index_cast %6 : i32 to index
    %c1 = arith.constant 1 : index
    %c0_7 = arith.constant 0 : index
    %8 = vector.load %arg2[%c0_6, %7, %c1, %c0_7] : memref<1x18x18x8xbf16, #tpu.memory_space<vmem>>, vector<1x8x16x8xbf16>
    %9 = vector.shape_cast %8 : vector<1x8x16x8xbf16> to vector<8x16x8xbf16>
    %c0_8 = arith.constant 0 : index
    %c0_9 = arith.constant 0 : index
    %c8 = arith.constant 8 : index
    %10 = vector.load %arg6[%c0_8, %c0_9, %c8] : memref<8x16x72xbf16, #tpu.memory_space<vmem>>, vector<8x16x8xbf16>
    tpu.vector_store %arg6[%c0_8, %c0_9, %c8], %9 {strides = array<i32>} : memref<8x16x72xbf16, #tpu.memory_space<vmem>>, vector<8x16x8xbf16>,
    %c0_i32_10 = arith.constant 0 : i32
    %11 = arith.addi %0, %c0_i32_10 : i32
    %c0_11 = arith.constant 0 : index
    %12 = arith.index_cast %11 : i32 to index
    %c2 = arith.constant 2 : index
    %c0_12 = arith.constant 0 : index
    %13 = vector.load %arg2[%c0_11, %12, %c2, %c0_12] : memref<1x18x18x8xbf16, #tpu.memory_space<vmem>>, vector<1x8x16x8xbf16>
    %14 = vector.shape_cast %13 : vector<1x8x16x8xbf16> to vector<8x16x8xbf16>
    %c0_13 = arith.constant 0 : index
    %c0_14 = arith.constant 0 : index
    %c16 = arith.constant 16 : index
    %15 = vector.load %arg6[%c0_13, %c0_14, %c16] : memref<8x16x72xbf16, #tpu.memory_space<vmem>>, vector<8x16x8xbf16>
    tpu.vector_store %arg6[%c0_13, %c0_14, %c16], %14 {strides = array<i32>} : memref<8x16x72xbf16, #tpu.memory_space<vmem>>, vector<8x16x8xbf16>,
    %c1_i32 = arith.constant 1 : i32
    %16 = arith.addi %0, %c1_i32 : i32
    %c0_15 = arith.constant 0 : index
    %17 = arith.index_cast %16 : i32 to index
    %c0_16 = arith.constant 0 : index
    %c0_17 = arith.constant 0 : index
    %18 = vector.load %arg2[%c0_15, %17, %c0_16, %c0_17] : memref<1x18x18x8xbf16, #tpu.memory_space<vmem>>, vector<1x8x16x8xbf16>
    %19 = vector.shape_cast %18 : vector<1x8x16x8xbf16> to vector<8x16x8xbf16>
    %c0_18 = arith.constant 0 : index
    %c0_19 = arith.constant 0 : index
    %c24 = arith.constant 24 : index
    %20 = vector.load %arg6[%c0_18, %c0_19, %c24] : memref<8x16x72xbf16, #tpu.memory_space<vmem>>, vector<8x16x8xbf16>
    tpu.vector_store %arg6[%c0_18, %c0_19, %c24], %19 {strides = array<i32>} : memref<8x16x72xbf16, #tpu.memory_space<vmem>>, vector<8x16x8xbf16>,
    %c1_i32_20 = arith.constant 1 : i32
    %21 = arith.addi %0, %c1_i32_20 : i32
    %c0_21 = arith.constant 0 : index
    %22 = arith.index_cast %21 : i32 to index
    %c1_22 = arith.constant 1 : index
    %c0_23 = arith.constant 0 : index
    %23 = vector.load %arg2[%c0_21, %22, %c1_22, %c0_23] : memref<1x18x18x8xbf16, #tpu.memory_space<vmem>>, vector<1x8x16x8xbf16>
    %24 = vector.shape_cast %23 : vector<1x8x16x8xbf16> to vector<8x16x8xbf16>
    %c0_24 = arith.constant 0 : index
    %c0_25 = arith.constant 0 : index
    %c32 = arith.constant 32 : index
    %25 = vector.load %arg6[%c0_24, %c0_25, %c32] : memref<8x16x72xbf16, #tpu.memory_space<vmem>>, vector<8x16x8xbf16>
    tpu.vector_store %arg6[%c0_24, %c0_25, %c32], %24 {strides = array<i32>} : memref<8x16x72xbf16, #tpu.memory_space<vmem>>, vector<8x16x8xbf16>,
    %c1_i32_26 = arith.constant 1 : i32
    %26 = arith.addi %0, %c1_i32_26 : i32
    %c0_27 = arith.constant 0 : index
    %27 = arith.index_cast %26 : i32 to index
    %c2_28 = arith.constant 2 : index
    %c0_29 = arith.constant 0 : index
    %28 = vector.load %arg2[%c0_27, %27, %c2_28, %c0_29] : memref<1x18x18x8xbf16, #tpu.memory_space<vmem>>, vector<1x8x16x8xbf16>
    %29 = vector.shape_cast %28 : vector<1x8x16x8xbf16> to vector<8x16x8xbf16>
    %c0_30 = arith.constant 0 : index
    %c0_31 = arith.constant 0 : index
    %c40 = arith.constant 40 : index
    %30 = vector.load %arg6[%c0_30, %c0_31, %c40] : memref<8x16x72xbf16, #tpu.memory_space<vmem>>, vector<8x16x8xbf16>
    tpu.vector_store %arg6[%c0_30, %c0_31, %c40], %29 {strides = array<i32>} : memref<8x16x72xbf16, #tpu.memory_space<vmem>>, vector<8x16x8xbf16>,
    %c2_i32 = arith.constant 2 : i32
    %31 = arith.addi %0, %c2_i32 : i32
    %c0_32 = arith.constant 0 : index
    %32 = arith.index_cast %31 : i32 to index
    %c0_33 = arith.constant 0 : index
    %c0_34 = arith.constant 0 : index
    %33 = vector.load %arg2[%c0_32, %32, %c0_33, %c0_34] : memref<1x18x18x8xbf16, #tpu.memory_space<vmem>>, vector<1x8x16x8xbf16>
    %34 = vector.shape_cast %33 : vector<1x8x16x8xbf16> to vector<8x16x8xbf16>
    %c0_35 = arith.constant 0 : index
    %c0_36 = arith.constant 0 : index
    %c48 = arith.constant 48 : index
    %35 = vector.load %arg6[%c0_35, %c0_36, %c48] : memref<8x16x72xbf16, #tpu.memory_space<vmem>>, vector<8x16x8xbf16>
    tpu.vector_store %arg6[%c0_35, %c0_36, %c48], %34 {strides = array<i32>} : memref<8x16x72xbf16, #tpu.memory_space<vmem>>, vector<8x16x8xbf16>,
    %c2_i32_37 = arith.constant 2 : i32
    %36 = arith.addi %0, %c2_i32_37 : i32
    %c0_38 = arith.constant 0 : index
    %37 = arith.index_cast %36 : i32 to index
    %c1_39 = arith.constant 1 : index
    %c0_40 = arith.constant 0 : index
    %38 = vector.load %arg2[%c0_38, %37, %c1_39, %c0_40] : memref<1x18x18x8xbf16, #tpu.memory_space<vmem>>, vector<1x8x16x8xbf16>
    %39 = vector.shape_cast %38 : vector<1x8x16x8xbf16> to vector<8x16x8xbf16>
    %c0_41 = arith.constant 0 : index
    %c0_42 = arith.constant 0 : index
    %c56 = arith.constant 56 : index
    %40 = vector.load %arg6[%c0_41, %c0_42, %c56] : memref<8x16x72xbf16, #tpu.memory_space<vmem>>, vector<8x16x8xbf16>
    tpu.vector_store %arg6[%c0_41, %c0_42, %c56], %39 {strides = array<i32>} : memref<8x16x72xbf16, #tpu.memory_space<vmem>>, vector<8x16x8xbf16>,
    %c2_i32_43 = arith.constant 2 : i32
    %41 = arith.addi %0, %c2_i32_43 : i32
    %c0_44 = arith.constant 0 : index
    %42 = arith.index_cast %41 : i32 to index
    %c2_45 = arith.constant 2 : index
    %c0_46 = arith.constant 0 : index
    %43 = vector.load %arg2[%c0_44, %42, %c2_45, %c0_46] : memref<1x18x18x8xbf16, #tpu.memory_space<vmem>>, vector<1x8x16x8xbf16>
    %44 = vector.shape_cast %43 : vector<1x8x16x8xbf16> to vector<8x16x8xbf16>
    %c0_47 = arith.constant 0 : index
    %c0_48 = arith.constant 0 : index
    %c64 = arith.constant 64 : index
    %45 = vector.load %arg6[%c0_47, %c0_48, %c64] : memref<8x16x72xbf16, #tpu.memory_space<vmem>>, vector<8x16x8xbf16>
    tpu.vector_store %arg6[%c0_47, %c0_48, %c64], %44 {strides = array<i32>} : memref<8x16x72xbf16, #tpu.memory_space<vmem>>, vector<8x16x8xbf16>,
    %c0_49 = arith.constant 0 : index
    %c0_50 = arith.constant 0 : index
    %c0_51 = arith.constant 0 : index
    %46 = vector.load %arg6[%c0_49, %c0_50, %c0_51] : memref<8x16x72xbf16, #tpu.memory_space<vmem>>, vector<8x16x72xbf16>
    %47 = vector.shape_cast %46 : vector<8x16x72xbf16> to vector<128x72xbf16>
    %c0_52 = arith.constant 0 : index
    %c0_53 = arith.constant 0 : index
    %48 = vector.load %arg3[%c0_52, %c0_53] : memref<72x128xbf16, #tpu.memory_space<vmem>>, vector<72x128xbf16>
    %cst = arith.constant dense<0.000000e+00> : vector<128x128xf32>
    %49 = tpu.matmul %47, %48, %cst {dimension_numbers = #tpu.dot_dimension_numbers<[1], [0], [0], [1], [0, 0, 1, 1], [], []>} : vector<128x72xbf16>, vector<72x128xbf16>, vector<128x128xf32> -> vector<128x128xf32>
    %c0_54 = arith.constant 0 : index
    %c0_55 = arith.constant 0 : index
    %50 = vector.load %arg4[%c0_54, %c0_55] : memref<2x128xf32, #tpu.memory_space<vmem>>, vector<1x128xf32>
    %51 = vector.broadcast %50 : vector<1x128xf32> to vector<128x128xf32>
    %52 = arith.mulf %49, %51 : vector<128x128xf32>
    %c1_56 = arith.constant 1 : index
    %c0_57 = arith.constant 0 : index
    %53 = vector.load %arg4[%c1_56, %c0_57] : memref<2x128xf32, #tpu.memory_space<vmem>>, vector<1x128xf32>
    %54 = vector.broadcast %53 : vector<1x128xf32> to vector<128x128xf32>
    %55 = arith.addf %52, %54 : vector<128x128xf32>
    %cst_58 = arith.constant 0.000000e+00 : f32
    %56 = vector.broadcast %cst_58 : f32 to vector<128x128xf32>
    %57 = arith.subf %56, %55 : vector<128x128xf32>
    %58 = math.exp %57 : vector<128x128xf32>
    %cst_59 = arith.constant 1.000000e+00 : f32
    %59 = vector.broadcast %cst_59 : f32 to vector<128x128xf32>
    %60 = arith.addf %59, %58 : vector<128x128xf32>
    %61 = tpu.reciprocal %60 {approx = true} : vector<128x128xf32> -> vector<128x128xf32>
    %62 = arith.mulf %55, %61 : vector<128x128xf32>
    %63 = vector.shape_cast %62 : vector<128x128xf32> to vector<8x16x128xf32>
    %64 = arith.truncf %63 : vector<8x16x128xf32> to vector<8x16x128xbf16>
    %c0_60 = arith.constant 0 : index
    %c0_61 = arith.constant 0 : index
    %c0_62 = arith.constant 0 : index
    %c0_63 = arith.constant 0 : index
    %65 = vector.load %arg5[%c0_60, %c0_61, %c0_62, %c0_63] : memref<1x8x16x128xbf16, #tpu.memory_space<vmem>>, vector<1x8x16x128xbf16>
    %66 = vector.shape_cast %65 : vector<1x8x16x128xbf16> to vector<8x16x128xbf16>
    %67 = vector.shape_cast %64 : vector<8x16x128xbf16> to vector<1x8x16x128xbf16>
    tpu.vector_store %arg5[%c0_60, %c0_61, %c0_62, %c0_63], %67 {strides = array<i32>} : memref<1x8x16x128xbf16, #tpu.memory_space<vmem>>, vector<1x8x16x128xbf16>,
    return
  }
  func.func @transform_0(%arg0: i32, %arg1: i32) -> (i32, i32, i32, i32) {
    %c0_i32 = arith.constant 0 : i32
    %c0_i32_0 = arith.constant 0 : i32
    %c0_i32_1 = arith.constant 0 : i32
    %c0_i32_2 = arith.constant 0 : i32
    return %arg0, %c0_i32, %c0_i32_0, %c0_i32_1 : i32, i32, i32, i32
  }
  func.func @transform_1(%arg0: i32, %arg1: i32) -> (i32, i32) {
    %c0_i32 = arith.constant 0 : i32
    %c0_i32_0 = arith.constant 0 : i32
    %c0_i32_1 = arith.constant 0 : i32
    return %c0_i32, %c0_i32_0 : i32, i32
  }
  func.func @transform_2(%arg0: i32, %arg1: i32) -> (i32, i32) {
    %c0_i32 = arith.constant 0 : i32
    %c0_i32_0 = arith.constant 0 : i32
    %c0_i32_1 = arith.constant 0 : i32
    return %c0_i32, %c0_i32_0 : i32, i32
  }
  func.func @transform_3(%arg0: i32, %arg1: i32) -> (i32, i32, i32, i32) {
    %c0_i32 = arith.constant 0 : i32
    %c0_i32_0 = arith.constant 0 : i32
    %c0_i32_1 = arith.constant 0 : i32
    return %arg0, %arg1, %c0_i32, %c0_i32_0 : i32, i32, i32, i32
  }
}

</mosaic_0001>

<llo_original>
// kernel: tpu_custom_call.1
$region0: #{tpu_custom_call.1}
  #allocation0 [shape = 'u32[]', space=smem, size = 0x4, offset = 0x4, fixed_abs, tag = 'smem constant byte address 0x4 - core index']
  #allocation1 [shape = 'u32[144,128]{1,0:T(1,128)}', space=vmem, size = 0x12000, scoped, tag = 'internal scratch']
  #allocation2 [shape = 'bf16[8,16,72]{2,1,0:T(8,128)(2,1)}', space=vmem, size = 0x8000, scoped, tag = 'scratch operand']
  %s0 = inlined_call_operand.vmem [shape: bf16[2,18,18,8], index: 0, kind: input, shape index: {}]
  %s1 = inlined_call_operand.vmem [shape: bf16[72,128], index: 1, kind: input, shape index: {}]
  %s2 = inlined_call_operand.vmem [shape: f32[2,128], index: 2, kind: input, shape index: {}]
  %s3 = inlined_call_operand.hbm [shape: bf16[2,16,16,128], index: 3, kind: output, shape index: {}]
  %s4 = sld [smem:[#allocation0]]
  $region45: #{tpu_custom_call.1} parent=0
    _
  %s6 = ssub.s32 1, %s4
  %s7 = scalar_select 0, %s6, %s4
  $region1: #{tpu_custom_call.1} parent=0
    #allocation3 [shape = 'u8[65536]{0}', space=vmem, size = 0x10000, scoped, tag = 'output window, operand 0']
    #allocation4 [shape = 's32[2]{0}', space=sflag, size = 0x8, scoped, tag = 'scoped memory for tpu_custom_call.1']
    %8 = vsyncpa [#allocation4], 0
    %s9 = scalar_lea.sflag [#allocation4], 1
    %10 = vsyncpa %s9, 0
    loop: start=0, step=1, limit=6
    $region2: #{tpu_custom_call.1} parent=1 // loop_pre_header
      _
    $region3: #{tpu_custom_call.1} parent=1 // loop_header
      %s12 = sphi 0, %s16
      %p13 = scmp.ge.s32.totalorder %s12, 6
      %s19 = sphi 0, %s31
      %s20 = sphi 0, %s27
      %s21 = sphi 0, %s19
      %s22 = sphi 0, %s20
      %s23 = sphi 0, %s21
      %s24 = sphi 0, %s22
      %s34 = sphi 0, %s36
      %s37 = sphi 0, %s34
      %s38 = sphi 0, %s37
      %s54 = sphi 0, %s38
      %s58 = sphi 0, %s58
      %s60 = sphi 0, %s58
      %s61 = sphi 0, %s60
      %s75 = sphi 0, %s61
      %s79 = sphi 0, %s79
      %s81 = sphi 0, %s79
      %s82 = sphi 0, %s81
      %s96 = sphi 0, %s82
      %s104 = sphi 0, %s106
      %s107 = sphi 0, %s104
      %s108 = sphi 0, %s107
      %s124 = sphi 0, %s108
    $region4: #{tpu_custom_call.1} parent=1 // loop_header_branch
      %15 = sbr.rel (%p13) target = $region8
    $region5: #{tpu_custom_call.1} parent=1 // loop_body
      %s17 = ssub.s32 %s12, 1
      %s18 = ssub.s32 %s12, 2
      %s25 = sadd.s32 1, %s20
      %p26 = scmp.ge.s32.totalorder %s25, 2
      %s27 = scalar_select %p26, 0, %s25
      %s28 = sadd.s32 1, %s19
      %s29 = scalar_select %p26, %s28, %s19
      %p30 = scmp.ge.s32.totalorder %s29, 2
      %s31 = scalar_select %p30, 0, %s29
      %s32 = ssub.s32 %s19, %s31
      %p33 = scmp.eq.s32.totalorder %s32, 0
      %s35 = sadd.s32 %s34, 1
      %s36 = scalar_select %p33, %s34, %s35
      %p39 = pneg %p33
      %p40 = scmp.eq.s32.totalorder %s12, 3
      %p41 = por %p39, %p40
      %p42 = scmp.ne.s32.totalorder %s34, %s37
      %p43 = scmp.eq.s32.totalorder %s12, 0
      %p44 = por %p42, %p43
      %p45 = scmp.ne.s32.totalorder %s34, %s37
      %p46 = scmp.eq.s32.totalorder %s17, 3
      %p47 = por %p45, %p46
      %p48 = scmp.ne.s32.totalorder %s37, %s38
      %p49 = scmp.eq.s32.totalorder %s17, 0
      %p50 = por %p48, %p49
      %p51 = scmp.ne.s32.totalorder %s37, %s38
      %p52 = scmp.eq.s32.totalorder %s18, 3
      %p53 = por %p51, %p52
      %p55 = scmp.ne.s32.totalorder %s38, %s54
      %p56 = scmp.eq.s32.totalorder %s18, 0
      %p57 = por %p55, %p56
      %s59 = sadd.s32 %s58, 1
      %p62 = scmp.eq.s32.totalorder %s12, 3
      %p63 = scmp.ne.s32.totalorder %s58, %s60
      %p64 = scmp.eq.s32.totalorder %s12, 0
      %p65 = por %p63, %p64
      %p66 = scmp.ne.s32.totalorder %s58, %s60
      %p67 = scmp.eq.s32.totalorder %s17, 3
      %p68 = por %p66, %p67
      %p69 = scmp.ne.s32.totalorder %s60, %s61
      %p70 = scmp.eq.s32.totalorder %s17, 0
      %p71 = por %p69, %p70
      %p72 = scmp.ne.s32.totalorder %s60, %s61
      %p73 = scmp.eq.s32.totalorder %s18, 3
      %p74 = por %p72, %p73
      %p76 = scmp.ne.s32.totalorder %s61, %s75
      %p77 = scmp.eq.s32.totalorder %s18, 0
      %p78 = por %p76, %p77
      %s80 = sadd.s32 %s79, 1
      %p83 = scmp.eq.s32.totalorder %s12, 3
      %p84 = scmp.ne.s32.totalorder %s79, %s81
      %p85 = scmp.eq.s32.totalorder %s12, 0
      %p86 = por %p84, %p85
      %p87 = scmp.ne.s32.totalorder %s79, %s81
      %p88 = scmp.eq.s32.totalorder %s17, 3
      %p89 = por %p87, %p88
      %p90 = scmp.ne.s32.totalorder %s81, %s82
      %p91 = scmp.eq.s32.totalorder %s17, 0
      %p92 = por %p90, %p91
      %p93 = scmp.ne.s32.totalorder %s81, %s82
      %p94 = scmp.eq.s32.totalorder %s18, 3
      %p95 = por %p93, %p94
      %p97 = scmp.ne.s32.totalorder %s82, %s96
      %p98 = scmp.eq.s32.totalorder %s18, 0
      %p99 = por %p97, %p98
      %s100 = ssub.s32 %s19, %s31
      %s101 = ssub.s32 %s20, %s27
      %s102 = sor.u32 %s100, %s101
      %p103 = scmp.eq.s32.totalorder %s102, 0
      %s105 = sadd.s32 %s104, 1
      %s106 = scalar_select %p103, %s104, %s105
      %p109 = pneg %p103
      %p110 = scmp.eq.s32.totalorder %s12, 3
      %p111 = por %p109, %p110
      %p112 = scmp.ne.s32.totalorder %s104, %s107
      %p113 = scmp.eq.s32.totalorder %s12, 0
      %p114 = por %p112, %p113
      %p115 = scmp.ne.s32.totalorder %s104, %s107
      %p116 = scmp.eq.s32.totalorder %s17, 3
      %p117 = por %p115, %p116
      %p118 = scmp.ne.s32.totalorder %s107, %s108
      %p119 = scmp.eq.s32.totalorder %s17, 0
      %p120 = por %p118, %p119
      %p121 = scmp.ne.s32.totalorder %s107, %s108
      %p122 = scmp.eq.s32.totalorder %s18, 3
      %p123 = por %p121, %p122
      %p125 = scmp.ne.s32.totalorder %s108, %s124
      %p126 = scmp.eq.s32.totalorder %s18, 0
      %p127 = por %p125, %p126
      %p128 = scmp.le.s32.totalorder 1, %s12
      %p129 = scmp.lt.s32.totalorder %s12, 5
      %p130 = pnand %p128, %p129
      %p131 = pneg %p130
      // Predicated region
      $region9: #{tpu_custom_call.1} parent=5 // pred_check
        _
      $region10: #{tpu_custom_call.1} parent=5 // pred_check_branch
        %133 = sbr.rel (%p130) target = $region12
      $region11: #{tpu_custom_call.1} parent=5 // pred_region
        %s134 = ssub.s32 %s12, 1
        // Predicated region
        $region13: #{tpu_custom_call.1} parent=11 // pred_check
          %p135 = pneg %p71
        $region14: #{tpu_custom_call.1} parent=11 // pred_check_branch
          %137 = sbr.rel (%p135) target = $region16
        $region15: #{tpu_custom_call.1} parent=11 // pred_region
          _
        $region16: #{tpu_custom_call.1} parent=11 // pred_fallthru
          _
        // Predicated region
        $region17: #{tpu_custom_call.1} parent=11 // pred_check
          %p138 = pneg %p92
        $region18: #{tpu_custom_call.1} parent=11 // pred_check_branch
          %140 = sbr.rel (%p138) target = $region20
        $region19: #{tpu_custom_call.1} parent=11 // pred_region
          _
        $region20: #{tpu_custom_call.1} parent=11 // pred_fallthru
          _
      $region12: #{tpu_custom_call.1} parent=5 // pred_fallthru
        _
      %p141 = scmp.lt.s32.totalorder %s12, 4
      // Predicated region
      $region21: #{tpu_custom_call.1} parent=5 // pred_check
        %p142 = pneg %p141
      $region22: #{tpu_custom_call.1} parent=5 // pred_check_branch
        %144 = sbr.rel (%p142) target = $region24
      $region23: #{tpu_custom_call.1} parent=5 // pred_region
        // Predicated region
        $region25: #{tpu_custom_call.1} parent=23 // pred_check
          %p145 = pneg %p44
        $region26: #{tpu_custom_call.1} parent=23 // pred_check_branch
          %147 = sbr.rel (%p145) target = $region28
        $region27: #{tpu_custom_call.1} parent=23 // pred_region
          %p148 = scmp.lt.s32.totalorder %s19, 1
          %s149 = scalar_select %p148, %s19, 1
          %s150 = smul.addr %s149, 54
          %s151 = smul.addr %s150, 4
          %s152 = scalar_lea.vmem %s0, %s151
        $region28: #{tpu_custom_call.1} parent=23 // pred_fallthru
          _
      $region24: #{tpu_custom_call.1} parent=5 // pred_fallthru
        _
      %p153 = scmp.le.s32.totalorder 1, %s12
      %p154 = scmp.lt.s32.totalorder %s12, 5
      %p155 = pnand %p153, %p154
      %p156 = pneg %p155
      // Predicated region
      $region29: #{tpu_custom_call.1} parent=5 // pred_check
        _
      $region30: #{tpu_custom_call.1} parent=5 // pred_check_branch
        %158 = sbr.rel (%p155) target = $region32
      $region31: #{tpu_custom_call.1} parent=5 // pred_region
        %s159 = ssub.s32 %s12, 1
        %p160 = scmp.lt.s32.totalorder %s21, 1
        %s161 = scalar_select %p160, %s21, 1
        %s162 = smul.addr %s161, 54
        %s163 = smul.addr %s162, 4
        %s164 = scalar_lea.vmem %s0, %s163
        %p165 = pneg %p50
        %p166 = pneg %p47
        %p167 = pneg %p71
        %p168 = pneg %p68
        %p169 = pneg %p92
        %p170 = pneg %p89
        %p171 = pneg %p120
        %p172 = pneg %p117
        %s173 = sand.u32 %s107, 1
        %s174 = scalar_lea.sflag [#allocation4], %s173
        %s175 = sand.u32 %s107, 1
        %s176 = smul.addr %s175, 64
        %s177 = scalar_lea.vmem [#allocation3], %s176
        %p178 = scmp.lt.s32.totalorder %s21, 1
        %s179 = scalar_select %p178, %s21, 1
        %s180 = smul.addr %s179, 54
        %s181 = smul.addr %s180, 4
        %s182 = scalar_lea.vmem %s0, %s181
        %s183 = smul.u32 8, %s22
        %s185 = smul.u32 %s22, 8
        %s186 = smul.u32 %s185, 3
        %s187 = smul.addr %s186, 4
        %s188 = scalar_lea.vmem %s182, %s187
        %v189 = vld [vmem:[%s188] sm:$0xf]
        %v190 = vld [vmem:[%s188 + $0x4] sm:$0xf]
        %v191 = vld [vmem:[%s188 + $0xc] sm:$0xf]
        %v192 = vld [vmem:[%s188 + $0x10] sm:$0xf]
        %v193 = vld [vmem:[%s188 + $0x18] sm:$0xf]
        %v194 = vld [vmem:[%s188 + $0x1c] sm:$0xf]
        %v195 = vld [vmem:[%s188 + $0x24] sm:$0xf]
        %v196 = vld [vmem:[%s188 + $0x28] sm:$0xf]
        %v197 = vld [vmem:[%s188 + $0x30] sm:$0xf]
        %v198 = vld [vmem:[%s188 + $0x34] sm:$0xf]
        %v199 = vld [vmem:[%s188 + $0x3c] sm:$0xf]
        %v200 = vld [vmem:[%s188 + $0x40] sm:$0xf]
        %v201 = vld [vmem:[%s188 + $0x48] sm:$0xf]
        %v202 = vld [vmem:[%s188 + $0x4c] sm:$0xf]
        %v203 = vld [vmem:[%s188 + $0x54] sm:$0xf]
        %v204 = vld [vmem:[%s188 + $0x58] sm:$0xf]
        %vm205 = vcmask 60416
        %206 = vst.msk [vmem:[#allocation2] sm:$0xf] %vm205, %v189
        %207 = vst.msk [vmem:[#allocation2 + $0x4] sm:$0xf] %vm205, %v190
        %208 = vst.msk [vmem:[#allocation2 + $0x8] sm:$0xf] %vm205, %v191
        %209 = vst.msk [vmem:[#allocation2 + $0xc] sm:$0xf] %vm205, %v192
        %210 = vst.msk [vmem:[#allocation2 + $0x10] sm:$0xf] %vm205, %v193
        %211 = vst.msk [vmem:[#allocation2 + $0x14] sm:$0xf] %vm205, %v194
        %212 = vst.msk [vmem:[#allocation2 + $0x18] sm:$0xf] %vm205, %v195
        %213 = vst.msk [vmem:[#allocation2 + $0x1c] sm:$0xf] %vm205, %v196
        %214 = vst.msk [vmem:[#allocation2 + $0x20] sm:$0xf] %vm205, %v197
        %215 = vst.msk [vmem:[#allocation2 + $0x24] sm:$0xf] %vm205, %v198
        %216 = vst.msk [vmem:[#allocation2 + $0x28] sm:$0xf] %vm205, %v199
        %217 = vst.msk [vmem:[#allocation2 + $0x2c] sm:$0xf] %vm205, %v200
        %218 = vst.msk [vmem:[#allocation2 + $0x30] sm:$0xf] %vm205, %v201
        %219 = vst.msk [vmem:[#allocation2 + $0x34] sm:$0xf] %vm205, %v202
        %220 = vst.msk [vmem:[#allocation2 + $0x38] sm:$0xf] %vm205, %v203
        %221 = vst.msk [vmem:[#allocation2 + $0x3c] sm:$0xf] %vm205, %v204
        %v222 = vld [vmem:[%s188] sm:$0xf]
        %v223 = vld [vmem:[%s188 + $0x4] sm:$0xf]
        %v224 = vld [vmem:[%s188 + $0x8] sm:$0x1]
        %v225 = vld [vmem:[%s188 + $0xc] sm:$0xf]
        %v226 = vld [vmem:[%s188 + $0x10] sm:$0xf]
        %v227 = vld [vmem:[%s188 + $0x14] sm:$0x1]
        %v228 = vld [vmem:[%s188 + $0x18] sm:$0xf]
        %v229 = vld [vmem:[%s188 + $0x1c] sm:$0xf]
        %v230 = vld [vmem:[%s188 + $0x20] sm:$0x1]
        %v231 = vld [vmem:[%s188 + $0x24] sm:$0xf]
        %v232 = vld [vmem:[%s188 + $0x28] sm:$0xf]
        %v233 = vld [vmem:[%s188 + $0x2c] sm:$0x1]
        %v234 = vld [vmem:[%s188 + $0x30] sm:$0xf]
        %v235 = vld [vmem:[%s188 + $0x34] sm:$0xf]
        %v236 = vld [vmem:[%s188 + $0x38] sm:$0x1]
        %v237 = vld [vmem:[%s188 + $0x3c] sm:$0xf]
        %v238 = vld [vmem:[%s188 + $0x40] sm:$0xf]
        %v239 = vld [vmem:[%s188 + $0x44] sm:$0x1]
        %v240 = vld [vmem:[%s188 + $0x48] sm:$0xf]
        %v241 = vld [vmem:[%s188 + $0x4c] sm:$0xf]
        %v242 = vld [vmem:[%s188 + $0x50] sm:$0x1]
        %v243 = vld [vmem:[%s188 + $0x54] sm:$0xf]
        %v244 = vld [vmem:[%s188 + $0x58] sm:$0xf]
        %v245 = vld [vmem:[%s188 + $0x5c] sm:$0x1]
        %vm246 = vsmask.f32 3328
        %vm247 = vsmask.f32 7440
        %vm248 = vmor %vm246, %vm247
        %v250 = vshrl.u32 %v222, 16
        %v252 = vrot.slane %v250, 4
        %v253 = vshll.u32 %v222, 16
        %v255 = vrot.slane %v253, 5
        %v256 = vor.u32 %v252, %v255
        %v257 = vrot.slane %v256, 4
        %v259 = vshll.u32 %v223, 16
        %v261 = vrot.slane %v259, 5
        %v262 = vsel %vm248, %v257, %v261
        %v263 = vshrl.u32 %v223, 16
        %v265 = vrot.slane %v263, 4
        %v266 = vor.u32 %v265, %v261
        %v267 = vrot.slane %v266, 4
        %v269 = vshll.u32 %v224, 16
        %v271 = vrot.slane %v269, 5
        %v272 = vsel %vm248, %v267, %v271
        %v274 = vshrl.u32 %v225, 16
        %v276 = vrot.slane %v274, 4
        %v277 = vshll.u32 %v225, 16
        %v279 = vrot.slane %v277, 5
        %v280 = vor.u32 %v276, %v279
        %v281 = vrot.slane %v280, 4
        %v283 = vshll.u32 %v226, 16
        %v285 = vrot.slane %v283, 5
        %v286 = vsel %vm248, %v281, %v285
        %v287 = vshrl.u32 %v226, 16
        %v289 = vrot.slane %v287, 4
        %v290 = vor.u32 %v289, %v285
        %v291 = vrot.slane %v290, 4
        %v293 = vshll.u32 %v227, 16
        %v295 = vrot.slane %v293, 5
        %v296 = vsel %vm248, %v291, %v295
        %v298 = vshrl.u32 %v228, 16
        %v300 = vrot.slane %v298, 4
        %v301 = vshll.u32 %v228, 16
        %v303 = vrot.slane %v301, 5
        %v304 = vor.u32 %v300, %v303
        %v305 = vrot.slane %v304, 4
        %v307 = vshll.u32 %v229, 16
        %v309 = vrot.slane %v307, 5
        %v310 = vsel %vm248, %v305, %v309
        %v311 = vshrl.u32 %v229, 16
        %v313 = vrot.slane %v311, 4
        %v314 = vor.u32 %v313, %v309
        %v315 = vrot.slane %v314, 4
        %v317 = vshll.u32 %v230, 16
        %v319 = vrot.slane %v317, 5
        %v320 = vsel %vm248, %v315, %v319
        %v322 = vshrl.u32 %v231, 16
        %v324 = vrot.slane %v322, 4
        %v325 = vshll.u32 %v231, 16
        %v327 = vrot.slane %v325, 5
        %v328 = vor.u32 %v324, %v327
        %v329 = vrot.slane %v328, 4
        %v331 = vshll.u32 %v232, 16
        %v333 = vrot.slane %v331, 5
        %v334 = vsel %vm248, %v329, %v333
        %v335 = vshrl.u32 %v232, 16
        %v337 = vrot.slane %v335, 4
        %v338 = vor.u32 %v337, %v333
        %v339 = vrot.slane %v338, 4
        %v341 = vshll.u32 %v233, 16
        %v343 = vrot.slane %v341, 5
        %v344 = vsel %vm248, %v339, %v343
        %v346 = vshrl.u32 %v234, 16
        %v348 = vrot.slane %v346, 4
        %v349 = vshll.u32 %v234, 16
        %v351 = vrot.slane %v349, 5
        %v352 = vor.u32 %v348, %v351
        %v353 = vrot.slane %v352, 4
        %v355 = vshll.u32 %v235, 16
        %v357 = vrot.slane %v355, 5
        %v358 = vsel %vm248, %v353, %v357
        %v359 = vshrl.u32 %v235, 16
        %v361 = vrot.slane %v359, 4
        %v362 = vor.u32 %v361, %v357
        %v363 = vrot.slane %v362, 4
        %v365 = vshll.u32 %v236, 16
        %v367 = vrot.slane %v365, 5
        %v368 = vsel %vm248, %v363, %v367
        %v370 = vshrl.u32 %v237, 16
        %v372 = vrot.slane %v370, 4
        %v373 = vshll.u32 %v237, 16
        %v375 = vrot.slane %v373, 5
        %v376 = vor.u32 %v372, %v375
        %v377 = vrot.slane %v376, 4
        %v379 = vshll.u32 %v238, 16
        %v381 = vrot.slane %v379, 5
        %v382 = vsel %vm248, %v377, %v381
        %v383 = vshrl.u32 %v238, 16
        %v385 = vrot.slane %v383, 4
        %v386 = vor.u32 %v385, %v381
        %v387 = vrot.slane %v386, 4
        %v389 = vshll.u32 %v239, 16
        %v391 = vrot.slane %v389, 5
        %v392 = vsel %vm248, %v387, %v391
        %v394 = vshrl.u32 %v240, 16
        %v396 = vrot.slane %v394, 4
        %v397 = vshll.u32 %v240, 16
        %v399 = vrot.slane %v397, 5
        %v400 = vor.u32 %v396, %v399
        %v401 = vrot.slane %v400, 4
        %v403 = vshll.u32 %v241, 16
        %v405 = vrot.slane %v403, 5
        %v406 = vsel %vm248, %v401, %v405
        %v407 = vshrl.u32 %v241, 16
        %v409 = vrot.slane %v407, 4
        %v410 = vor.u32 %v409, %v405
        %v411 = vrot.slane %v410, 4
        %v413 = vshll.u32 %v242, 16
        %v415 = vrot.slane %v413, 5
        %v416 = vsel %vm248, %v411, %v415
        %v418 = vshrl.u32 %v243, 16
        %v420 = vrot.slane %v418, 4
        %v421 = vshll.u32 %v243, 16
        %v423 = vrot.slane %v421, 5
        %v424 = vor.u32 %v420, %v423
        %v425 = vrot.slane %v424, 4
        %v427 = vshll.u32 %v244, 16
        %v429 = vrot.slane %v427, 5
        %v430 = vsel %vm248, %v425, %v429
        %v431 = vshrl.u32 %v244, 16
        %v433 = vrot.slane %v431, 4
        %v434 = vor.u32 %v433, %v429
        %v435 = vrot.slane %v434, 4
        %v437 = vshll.u32 %v245, 16
        %v439 = vrot.slane %v437, 5
        %v440 = vsel %vm248, %v435, %v439
        %441 = vrot.lane.b32.xlu0 %v262, 8
        %v442 = vpop.permute.xlu0 %441
        %443 = vrot.lane.b32.xlu0 %v272, 8
        %v444 = vpop.permute.xlu0 %443
        %445 = vrot.lane.b32.xlu0 %v286, 8
        %v446 = vpop.permute.xlu0 %445
        %447 = vrot.lane.b32.xlu0 %v296, 8
        %v448 = vpop.permute.xlu0 %447
        %449 = vrot.lane.b32.xlu0 %v310, 8
        %v450 = vpop.permute.xlu0 %449
        %451 = vrot.lane.b32.xlu0 %v320, 8
        %v452 = vpop.permute.xlu0 %451
        %453 = vrot.lane.b32.xlu0 %v334, 8
        %v454 = vpop.permute.xlu0 %453
        %455 = vrot.lane.b32.xlu0 %v344, 8
        %v456 = vpop.permute.xlu0 %455
        %457 = vrot.lane.b32.xlu0 %v358, 8
        %v458 = vpop.permute.xlu0 %457
        %459 = vrot.lane.b32.xlu0 %v368, 8
        %v460 = vpop.permute.xlu0 %459
        %461 = vrot.lane.b32.xlu0 %v382, 8
        %v462 = vpop.permute.xlu0 %461
        %463 = vrot.lane.b32.xlu0 %v392, 8
        %v464 = vpop.permute.xlu0 %463
        %465 = vrot.lane.b32.xlu0 %v406, 8
        %v466 = vpop.permute.xlu0 %465
        %467 = vrot.lane.b32.xlu0 %v416, 8
        %v468 = vpop.permute.xlu0 %467
        %469 = vrot.lane.b32.xlu0 %v430, 8
        %v470 = vpop.permute.xlu0 %469
        %471 = vrot.lane.b32.xlu0 %v440, 8
        %v472 = vpop.permute.xlu0 %471
        %vm489 = vcmask 126016
        %490 = vst.msk [vmem:[#allocation2] sm:$0xf] %vm489, %v442
        %491 = vst.msk [vmem:[#allocation2 + $0x4] sm:$0xf] %vm489, %v444
        %492 = vst.msk [vmem:[#allocation2 + $0x8] sm:$0xf] %vm489, %v446
        %493 = vst.msk [vmem:[#allocation2 + $0xc] sm:$0xf] %vm489, %v448
        %494 = vst.msk [vmem:[#allocation2 + $0x10] sm:$0xf] %vm489, %v450
        %495 = vst.msk [vmem:[#allocation2 + $0x14] sm:$0xf] %vm489, %v452
        %496 = vst.msk [vmem:[#allocation2 + $0x18] sm:$0xf] %vm489, %v454
        %497 = vst.msk [vmem:[#allocation2 + $0x1c] sm:$0xf] %vm489, %v456
        %498 = vst.msk [vmem:[#allocation2 + $0x20] sm:$0xf] %vm489, %v458
        %499 = vst.msk [vmem:[#allocation2 + $0x24] sm:$0xf] %vm489, %v460
        %500 = vst.msk [vmem:[#allocation2 + $0x28] sm:$0xf] %vm489, %v462
        %501 = vst.msk [vmem:[#allocation2 + $0x2c] sm:$0xf] %vm489, %v464
        %502 = vst.msk [vmem:[#allocation2 + $0x30] sm:$0xf] %vm489, %v466
        %503 = vst.msk [vmem:[#allocation2 + $0x34] sm:$0xf] %vm489, %v468
        %504 = vst.msk [vmem:[#allocation2 + $0x38] sm:$0xf] %vm489, %v470
        %505 = vst.msk [vmem:[#allocation2 + $0x3c] sm:$0xf] %vm489, %v472
        %v506 = vld [vmem:[%s188] sm:$0xe]
        %v507 = vld [vmem:[%s188 + $0x4] sm:$0xf]
        %v508 = vld [vmem:[%s188 + $0x8] sm:$0x1]
        %v509 = vld [vmem:[%s188 + $0xc] sm:$0xe]
        %v510 = vld [vmem:[%s188 + $0x10] sm:$0xf]
        %v511 = vld [vmem:[%s188 + $0x14] sm:$0x1]
        %v512 = vld [vmem:[%s188 + $0x18] sm:$0xe]
        %v513 = vld [vmem:[%s188 + $0x1c] sm:$0xf]
        %v514 = vld [vmem:[%s188 + $0x20] sm:$0x1]
        %v515 = vld [vmem:[%s188 + $0x24] sm:$0xe]
        %v516 = vld [vmem:[%s188 + $0x28] sm:$0xf]
        %v517 = vld [vmem:[%s188 + $0x2c] sm:$0x1]
        %v518 = vld [vmem:[%s188 + $0x30] sm:$0xe]
        %v519 = vld [vmem:[%s188 + $0x34] sm:$0xf]
        %v520 = vld [vmem:[%s188 + $0x38] sm:$0x1]
        %v521 = vld [vmem:[%s188 + $0x3c] sm:$0xe]
        %v522 = vld [vmem:[%s188 + $0x40] sm:$0xf]
        %v523 = vld [vmem:[%s188 + $0x44] sm:$0x1]
        %v524 = vld [vmem:[%s188 + $0x48] sm:$0xe]
        %v525 = vld [vmem:[%s188 + $0x4c] sm:$0xf]
        %v526 = vld [vmem:[%s188 + $0x50] sm:$0x1]
        %v527 = vld [vmem:[%s188 + $0x54] sm:$0xe]
        %v528 = vld [vmem:[%s188 + $0x58] sm:$0xf]
        %v529 = vld [vmem:[%s188 + $0x5c] sm:$0x1]
        %vm554 = vcmask 1042432
        %vm555 = vcmask 1046532
        %vm556 = vmor %vm554, %vm555
        %v557 = vrot.slane %v506, 5
        %v558 = vrot.slane %v557, 4
        %v559 = vrot.slane %v507, 5
        %v560 = vsel %vm556, %v558, %v559
        %v561 = vrot.slane %v559, 4
        %v562 = vrot.slane %v508, 5
        %v563 = vsel %vm556, %v561, %v562
        %v564 = vrot.slane %v509, 5
        %v565 = vrot.slane %v564, 4
        %v566 = vrot.slane %v510, 5
        %v567 = vsel %vm556, %v565, %v566
        %v568 = vrot.slane %v566, 4
        %v569 = vrot.slane %v511, 5
        %v570 = vsel %vm556, %v568, %v569
        %v571 = vrot.slane %v512, 5
        %v572 = vrot.slane %v571, 4
        %v573 = vrot.slane %v513, 5
        %v574 = vsel %vm556, %v572, %v573
        %v575 = vrot.slane %v573, 4
        %v576 = vrot.slane %v514, 5
        %v577 = vsel %vm556, %v575, %v576
        %v578 = vrot.slane %v515, 5
        %v579 = vrot.slane %v578, 4
        %v580 = vrot.slane %v516, 5
        %v581 = vsel %vm556, %v579, %v580
        %v582 = vrot.slane %v580, 4
        %v583 = vrot.slane %v517, 5
        %v584 = vsel %vm556, %v582, %v583
        %v585 = vrot.slane %v518, 5
        %v586 = vrot.slane %v585, 4
        %v587 = vrot.slane %v519, 5
        %v588 = vsel %vm556, %v586, %v587
        %v589 = vrot.slane %v587, 4
        %v590 = vrot.slane %v520, 5
        %v591 = vsel %vm556, %v589, %v590
        %v592 = vrot.slane %v521, 5
        %v593 = vrot.slane %v592, 4
        %v594 = vrot.slane %v522, 5
        %v595 = vsel %vm556, %v593, %v594
        %v596 = vrot.slane %v594, 4
        %v597 = vrot.slane %v523, 5
        %v598 = vsel %vm556, %v596, %v597
        %v599 = vrot.slane %v524, 5
        %v600 = vrot.slane %v599, 4
        %v601 = vrot.slane %v525, 5
        %v602 = vsel %vm556, %v600, %v601
        %v603 = vrot.slane %v601, 4
        %v604 = vrot.slane %v526, 5
        %v605 = vsel %vm556, %v603, %v604
        %v606 = vrot.slane %v527, 5
        %v607 = vrot.slane %v606, 4
        %v608 = vrot.slane %v528, 5
        %v609 = vsel %vm556, %v607, %v608
        %v610 = vrot.slane %v608, 4
        %v611 = vrot.slane %v529, 5
        %v612 = vsel %vm556, %v610, %v611
        %613 = vrot.lane.b32.xlu0 %v560, 16
        %v614 = vpop.permute.xlu0 %613
        %615 = vrot.lane.b32.xlu0 %v563, 16
        %v616 = vpop.permute.xlu0 %615
        %617 = vrot.lane.b32.xlu0 %v567, 16
        %v618 = vpop.permute.xlu0 %617
        %619 = vrot.lane.b32.xlu0 %v570, 16
        %v620 = vpop.permute.xlu0 %619
        %621 = vrot.lane.b32.xlu0 %v574, 16
        %v622 = vpop.permute.xlu0 %621
        %623 = vrot.lane.b32.xlu0 %v577, 16
        %v624 = vpop.permute.xlu0 %623
        %625 = vrot.lane.b32.xlu0 %v581, 16
        %v626 = vpop.permute.xlu0 %625
        %627 = vrot.lane.b32.xlu0 %v584, 16
        %v628 = vpop.permute.xlu0 %627
        %629 = vrot.lane.b32.xlu0 %v588, 16
        %v630 = vpop.permute.xlu0 %629
        %631 = vrot.lane.b32.xlu0 %v591, 16
        %v632 = vpop.permute.xlu0 %631
        %633 = vrot.lane.b32.xlu0 %v595, 16
        %v634 = vpop.permute.xlu0 %633
        %635 = vrot.lane.b32.xlu0 %v598, 16
        %v636 = vpop.permute.xlu0 %635
        %637 = vrot.lane.b32.xlu0 %v602, 16
        %v638 = vpop.permute.xlu0 %637
        %639 = vrot.lane.b32.xlu0 %v605, 16
        %v640 = vpop.permute.xlu0 %639
        %641 = vrot.lane.b32.xlu0 %v609, 16
        %v642 = vpop.permute.xlu0 %641
        %643 = vrot.lane.b32.xlu0 %v612, 16
        %v644 = vpop.permute.xlu0 %643
        %vm661 = vcmask 191616
        %662 = vst.msk [vmem:[#allocation2] sm:$0xf] %vm661, %v614
        %663 = vst.msk [vmem:[#allocation2 + $0x4] sm:$0xf] %vm661, %v616
        %664 = vst.msk [vmem:[#allocation2 + $0x8] sm:$0xf] %vm661, %v618
        %665 = vst.msk [vmem:[#allocation2 + $0xc] sm:$0xf] %vm661, %v620
        %666 = vst.msk [vmem:[#allocation2 + $0x10] sm:$0xf] %vm661, %v622
        %667 = vst.msk [vmem:[#allocation2 + $0x14] sm:$0xf] %vm661, %v624
        %668 = vst.msk [vmem:[#allocation2 + $0x18] sm:$0xf] %vm661, %v626
        %669 = vst.msk [vmem:[#allocation2 + $0x1c] sm:$0xf] %vm661, %v628
        %670 = vst.msk [vmem:[#allocation2 + $0x20] sm:$0xf] %vm661, %v630
        %671 = vst.msk [vmem:[#allocation2 + $0x24] sm:$0xf] %vm661, %v632
        %672 = vst.msk [vmem:[#allocation2 + $0x28] sm:$0xf] %vm661, %v634
        %673 = vst.msk [vmem:[#allocation2 + $0x2c] sm:$0xf] %vm661, %v636
        %674 = vst.msk [vmem:[#allocation2 + $0x30] sm:$0xf] %vm661, %v638
        %675 = vst.msk [vmem:[#allocation2 + $0x34] sm:$0xf] %vm661, %v640
        %676 = vst.msk [vmem:[#allocation2 + $0x38] sm:$0xf] %vm661, %v642
        %677 = vst.msk [vmem:[#allocation2 + $0x3c] sm:$0xf] %vm661, %v644
        %s678 = sadd.s32 %s185, 1
        %s679 = smul.u32 %s678, 3
        %s680 = smul.addr %s679, 4
        %s681 = scalar_lea.vmem %s182, %s680
        %v682 = vld [vmem:[%s681] sm:$0xf]
        %v683 = vld [vmem:[%s681 + $0x4] sm:$0xf]
        %v684 = vld [vmem:[%s681 + $0xc] sm:$0xf]
        %v685 = vld [vmem:[%s681 + $0x10] sm:$0xf]
        %v686 = vld [vmem:[%s681 + $0x18] sm:$0xf]
        %v687 = vld [vmem:[%s681 + $0x1c] sm:$0xf]
        %v688 = vld [vmem:[%s681 + $0x24] sm:$0xf]
        %v689 = vld [vmem:[%s681 + $0x28] sm:$0xf]
        %v690 = vld [vmem:[%s681 + $0x30] sm:$0xf]
        %v691 = vld [vmem:[%s681 + $0x34] sm:$0xf]
        %v692 = vld [vmem:[%s681 + $0x3c] sm:$0xf]
        %v693 = vld [vmem:[%s681 + $0x40] sm:$0xf]
        %v694 = vld [vmem:[%s681 + $0x48] sm:$0xf]
        %v695 = vld [vmem:[%s681 + $0x4c] sm:$0xf]
        %v696 = vld [vmem:[%s681 + $0x54] sm:$0xf]
        %v697 = vld [vmem:[%s681 + $0x58] sm:$0xf]
        %714 = vrot.lane.b32.xlu0 %v682, 24
        %v715 = vpop.permute.xlu0 %714
        %716 = vrot.lane.b32.xlu0 %v683, 24
        %v717 = vpop.permute.xlu0 %716
        %718 = vrot.lane.b32.xlu0 %v684, 24
        %v719 = vpop.permute.xlu0 %718
        %720 = vrot.lane.b32.xlu0 %v685, 24
        %v721 = vpop.permute.xlu0 %720
        %722 = vrot.lane.b32.xlu0 %v686, 24
        %v723 = vpop.permute.xlu0 %722
        %724 = vrot.lane.b32.xlu0 %v687, 24
        %v725 = vpop.permute.xlu0 %724
        %726 = vrot.lane.b32.xlu0 %v688, 24
        %v727 = vpop.permute.xlu0 %726
        %728 = vrot.lane.b32.xlu0 %v689, 24
        %v729 = vpop.permute.xlu0 %728
        %730 = vrot.lane.b32.xlu0 %v690, 24
        %v731 = vpop.permute.xlu0 %730
        %732 = vrot.lane.b32.xlu0 %v691, 24
        %v733 = vpop.permute.xlu0 %732
        %734 = vrot.lane.b32.xlu0 %v692, 24
        %v735 = vpop.permute.xlu0 %734
        %736 = vrot.lane.b32.xlu0 %v693, 24
        %v737 = vpop.permute.xlu0 %736
        %738 = vrot.lane.b32.xlu0 %v694, 24
        %v739 = vpop.permute.xlu0 %738
        %740 = vrot.lane.b32.xlu0 %v695, 24
        %v741 = vpop.permute.xlu0 %740
        %742 = vrot.lane.b32.xlu0 %v696, 24
        %v743 = vpop.permute.xlu0 %742
        %744 = vrot.lane.b32.xlu0 %v697, 24
        %v745 = vpop.permute.xlu0 %744
        %vm762 = vcmask 257216
        %763 = vst.msk [vmem:[#allocation2] sm:$0xf] %vm762, %v715
        %764 = vst.msk [vmem:[#allocation2 + $0x4] sm:$0xf] %vm762, %v717
        %765 = vst.msk [vmem:[#allocation2 + $0x8] sm:$0xf] %vm762, %v719
        %766 = vst.msk [vmem:[#allocation2 + $0xc] sm:$0xf] %vm762, %v721
        %767 = vst.msk [vmem:[#allocation2 + $0x10] sm:$0xf] %vm762, %v723
        %768 = vst.msk [vmem:[#allocation2 + $0x14] sm:$0xf] %vm762, %v725
        %769 = vst.msk [vmem:[#allocation2 + $0x18] sm:$0xf] %vm762, %v727
        %770 = vst.msk [vmem:[#allocation2 + $0x1c] sm:$0xf] %vm762, %v729
        %771 = vst.msk [vmem:[#allocation2 + $0x20] sm:$0xf] %vm762, %v731
        %772 = vst.msk [vmem:[#allocation2 + $0x24] sm:$0xf] %vm762, %v733
        %773 = vst.msk [vmem:[#allocation2 + $0x28] sm:$0xf] %vm762, %v735
        %774 = vst.msk [vmem:[#allocation2 + $0x2c] sm:$0xf] %vm762, %v737
        %775 = vst.msk [vmem:[#allocation2 + $0x30] sm:$0xf] %vm762, %v739
        %776 = vst.msk [vmem:[#allocation2 + $0x34] sm:$0xf] %vm762, %v741
        %777 = vst.msk [vmem:[#allocation2 + $0x38] sm:$0xf] %vm762, %v743
        %778 = vst.msk [vmem:[#allocation2 + $0x3c] sm:$0xf] %vm762, %v745
        %v779 = vld [vmem:[%s681] sm:$0xf]
        %v780 = vld [vmem:[%s681 + $0x4] sm:$0xf]
        %v781 = vld [vmem:[%s681 + $0x8] sm:$0x1]
        %v782 = vld [vmem:[%s681 + $0xc] sm:$0xf]
        %v783 = vld [vmem:[%s681 + $0x10] sm:$0xf]
        %v784 = vld [vmem:[%s681 + $0x14] sm:$0x1]
        %v785 = vld [vmem:[%s681 + $0x18] sm:$0xf]
        %v786 = vld [vmem:[%s681 + $0x1c] sm:$0xf]
        %v787 = vld [vmem:[%s681 + $0x20] sm:$0x1]
        %v788 = vld [vmem:[%s681 + $0x24] sm:$0xf]
        %v789 = vld [vmem:[%s681 + $0x28] sm:$0xf]
        %v790 = vld [vmem:[%s681 + $0x2c] sm:$0x1]
        %v791 = vld [vmem:[%s681 + $0x30] sm:$0xf]
        %v792 = vld [vmem:[%s681 + $0x34] sm:$0xf]
        %v793 = vld [vmem:[%s681 + $0x38] sm:$0x1]
        %v794 = vld [vmem:[%s681 + $0x3c] sm:$0xf]
        %v795 = vld [vmem:[%s681 + $0x40] sm:$0xf]
        %v796 = vld [vmem:[%s681 + $0x44] sm:$0x1]
        %v797 = vld [vmem:[%s681 + $0x48] sm:$0xf]
        %v798 = vld [vmem:[%s681 + $0x4c] sm:$0xf]
        %v799 = vld [vmem:[%s681 + $0x50] sm:$0x1]
        %v800 = vld [vmem:[%s681 + $0x54] sm:$0xf]
        %v801 = vld [vmem:[%s681 + $0x58] sm:$0xf]
        %v802 = vld [vmem:[%s681 + $0x5c] sm:$0x1]
        %v804 = vshrl.u32 %v779, 16
        %v806 = vrot.slane %v804, 4
        %v807 = vshll.u32 %v779, 16
        %v809 = vrot.slane %v807, 5
        %v810 = vor.u32 %v806, %v809
        %v811 = vrot.slane %v810, 4
        %v813 = vshll.u32 %v780, 16
        %v815 = vrot.slane %v813, 5
        %v816 = vsel %vm248, %v811, %v815
        %v817 = vshrl.u32 %v780, 16
        %v819 = vrot.slane %v817, 4
        %v820 = vor.u32 %v819, %v815
        %v821 = vrot.slane %v820, 4
        %v823 = vshll.u32 %v781, 16
        %v825 = vrot.slane %v823, 5
        %v826 = vsel %vm248, %v821, %v825
        %v828 = vshrl.u32 %v782, 16
        %v830 = vrot.slane %v828, 4
        %v831 = vshll.u32 %v782, 16
        %v833 = vrot.slane %v831, 5
        %v834 = vor.u32 %v830, %v833
        %v835 = vrot.slane %v834, 4
        %v837 = vshll.u32 %v783, 16
        %v839 = vrot.slane %v837, 5
        %v840 = vsel %vm248, %v835, %v839
        %v841 = vshrl.u32 %v783, 16
        %v843 = vrot.slane %v841, 4
        %v844 = vor.u32 %v843, %v839
        %v845 = vrot.slane %v844, 4
        %v847 = vshll.u32 %v784, 16
        %v849 = vrot.slane %v847, 5
        %v850 = vsel %vm248, %v845, %v849
        %v852 = vshrl.u32 %v785, 16
        %v854 = vrot.slane %v852, 4
        %v855 = vshll.u32 %v785, 16
        %v857 = vrot.slane %v855, 5
        %v858 = vor.u32 %v854, %v857
        %v859 = vrot.slane %v858, 4
        %v861 = vshll.u32 %v786, 16
        %v863 = vrot.slane %v861, 5
        %v864 = vsel %vm248, %v859, %v863
        %v865 = vshrl.u32 %v786, 16
        %v867 = vrot.slane %v865, 4
        %v868 = vor.u32 %v867, %v863
        %v869 = vrot.slane %v868, 4
        %v871 = vshll.u32 %v787, 16
        %v873 = vrot.slane %v871, 5
        %v874 = vsel %vm248, %v869, %v873
        %v876 = vshrl.u32 %v788, 16
        %v878 = vrot.slane %v876, 4
        %v879 = vshll.u32 %v788, 16
        %v881 = vrot.slane %v879, 5
        %v882 = vor.u32 %v878, %v881
        %v883 = vrot.slane %v882, 4
        %v885 = vshll.u32 %v789, 16
        %v887 = vrot.slane %v885, 5
        %v888 = vsel %vm248, %v883, %v887
        %v889 = vshrl.u32 %v789, 16
        %v891 = vrot.slane %v889, 4
        %v892 = vor.u32 %v891, %v887
        %v893 = vrot.slane %v892, 4
        %v895 = vshll.u32 %v790, 16
        %v897 = vrot.slane %v895, 5
        %v898 = vsel %vm248, %v893, %v897
        %v900 = vshrl.u32 %v791, 16
        %v902 = vrot.slane %v900, 4
        %v903 = vshll.u32 %v791, 16
        %v905 = vrot.slane %v903, 5
        %v906 = vor.u32 %v902, %v905
        %v907 = vrot.slane %v906, 4
        %v909 = vshll.u32 %v792, 16
        %v911 = vrot.slane %v909, 5
        %v912 = vsel %vm248, %v907, %v911
        %v913 = vshrl.u32 %v792, 16
        %v915 = vrot.slane %v913, 4
        %v916 = vor.u32 %v915, %v911
        %v917 = vrot.slane %v916, 4
        %v919 = vshll.u32 %v793, 16
        %v921 = vrot.slane %v919, 5
        %v922 = vsel %vm248, %v917, %v921
        %v924 = vshrl.u32 %v794, 16
        %v926 = vrot.slane %v924, 4
        %v927 = vshll.u32 %v794, 16
        %v929 = vrot.slane %v927, 5
        %v930 = vor.u32 %v926, %v929
        %v931 = vrot.slane %v930, 4
        %v933 = vshll.u32 %v795, 16
        %v935 = vrot.slane %v933, 5
        %v936 = vsel %vm248, %v931, %v935
        %v937 = vshrl.u32 %v795, 16
        %v939 = vrot.slane %v937, 4
        %v940 = vor.u32 %v939, %v935
        %v941 = vrot.slane %v940, 4
        %v943 = vshll.u32 %v796, 16
        %v945 = vrot.slane %v943, 5
        %v946 = vsel %vm248, %v941, %v945
        %v948 = vshrl.u32 %v797, 16
        %v950 = vrot.slane %v948, 4
        %v951 = vshll.u32 %v797, 16
        %v953 = vrot.slane %v951, 5
        %v954 = vor.u32 %v950, %v953
        %v955 = vrot.slane %v954, 4
        %v957 = vshll.u32 %v798, 16
        %v959 = vrot.slane %v957, 5
        %v960 = vsel %vm248, %v955, %v959
        %v961 = vshrl.u32 %v798, 16
        %v963 = vrot.slane %v961, 4
        %v964 = vor.u32 %v963, %v959
        %v965 = vrot.slane %v964, 4
        %v967 = vshll.u32 %v799, 16
        %v969 = vrot.slane %v967, 5
        %v970 = vsel %vm248, %v965, %v969
        %v972 = vshrl.u32 %v800, 16
        %v974 = vrot.slane %v972, 4
        %v975 = vshll.u32 %v800, 16
        %v977 = vrot.slane %v975, 5
        %v978 = vor.u32 %v974, %v977
        %v979 = vrot.slane %v978, 4
        %v981 = vshll.u32 %v801, 16
        %v983 = vrot.slane %v981, 5
        %v984 = vsel %vm248, %v979, %v983
        %v985 = vshrl.u32 %v801, 16
        %v987 = vrot.slane %v985, 4
        %v988 = vor.u32 %v987, %v983
        %v989 = vrot.slane %v988, 4
        %v991 = vshll.u32 %v802, 16
        %v993 = vrot.slane %v991, 5
        %v994 = vsel %vm248, %v989, %v993
        %995 = vrot.lane.b32.xlu0 %v816, 32
        %v996 = vpop.permute.xlu0 %995
        %997 = vrot.lane.b32.xlu0 %v826, 32
        %v998 = vpop.permute.xlu0 %997
        %999 = vrot.lane.b32.xlu0 %v840, 32
        %v1000 = vpop.permute.xlu0 %999
        %1001 = vrot.lane.b32.xlu0 %v850, 32
        %v1002 = vpop.permute.xlu0 %1001
        %1003 = vrot.lane.b32.xlu0 %v864, 32
        %v1004 = vpop.permute.xlu0 %1003
        %1005 = vrot.lane.b32.xlu0 %v874, 32
        %v1006 = vpop.permute.xlu0 %1005
        %1007 = vrot.lane.b32.xlu0 %v888, 32
        %v1008 = vpop.permute.xlu0 %1007
        %1009 = vrot.lane.b32.xlu0 %v898, 32
        %v1010 = vpop.permute.xlu0 %1009
        %1011 = vrot.lane.b32.xlu0 %v912, 32
        %v1012 = vpop.permute.xlu0 %1011
        %1013 = vrot.lane.b32.xlu0 %v922, 32
        %v1014 = vpop.permute.xlu0 %1013
        %1015 = vrot.lane.b32.xlu0 %v936, 32
        %v1016 = vpop.permute.xlu0 %1015
        %1017 = vrot.lane.b32.xlu0 %v946, 32
        %v1018 = vpop.permute.xlu0 %1017
        %1019 = vrot.lane.b32.xlu0 %v960, 32
        %v1020 = vpop.permute.xlu0 %1019
        %1021 = vrot.lane.b32.xlu0 %v970, 32
        %v1022 = vpop.permute.xlu0 %1021
        %1023 = vrot.lane.b32.xlu0 %v984, 32
        %v1024 = vpop.permute.xlu0 %1023
        %1025 = vrot.lane.b32.xlu0 %v994, 32
        %v1026 = vpop.permute.xlu0 %1025
        %vm1043 = vcmask 322816
        %1044 = vst.msk [vmem:[#allocation2] sm:$0xf] %vm1043, %v996
        %1045 = vst.msk [vmem:[#allocation2 + $0x4] sm:$0xf] %vm1043, %v998
        %1046 = vst.msk [vmem:[#allocation2 + $0x8] sm:$0xf] %vm1043, %v1000
        %1047 = vst.msk [vmem:[#allocation2 + $0xc] sm:$0xf] %vm1043, %v1002
        %1048 = vst.msk [vmem:[#allocation2 + $0x10] sm:$0xf] %vm1043, %v1004
        %1049 = vst.msk [vmem:[#allocation2 + $0x14] sm:$0xf] %vm1043, %v1006
        %1050 = vst.msk [vmem:[#allocation2 + $0x18] sm:$0xf] %vm1043, %v1008
        %1051 = vst.msk [vmem:[#allocation2 + $0x1c] sm:$0xf] %vm1043, %v1010
        %1052 = vst.msk [vmem:[#allocation2 + $0x20] sm:$0xf] %vm1043, %v1012
        %1053 = vst.msk [vmem:[#allocation2 + $0x24] sm:$0xf] %vm1043, %v1014
        %1054 = vst.msk [vmem:[#allocation2 + $0x28] sm:$0xf] %vm1043, %v1016
        %1055 = vst.msk [vmem:[#allocation2 + $0x2c] sm:$0xf] %vm1043, %v1018
        %1056 = vst.msk [vmem:[#allocation2 + $0x30] sm:$0xf] %vm1043, %v1020
        %1057 = vst.msk [vmem:[#allocation2 + $0x34] sm:$0xf] %vm1043, %v1022
        %1058 = vst.msk [vmem:[#allocation2 + $0x38] sm:$0xf] %vm1043, %v1024
        %1059 = vst.msk [vmem:[#allocation2 + $0x3c] sm:$0xf] %vm1043, %v1026
        %v1060 = vld [vmem:[%s681] sm:$0xe]
        %v1061 = vld [vmem:[%s681 + $0x4] sm:$0xf]
        %v1062 = vld [vmem:[%s681 + $0x8] sm:$0x1]
        %v1063 = vld [vmem:[%s681 + $0xc] sm:$0xe]
        %v1064 = vld [vmem:[%s681 + $0x10] sm:$0xf]
        %v1065 = vld [vmem:[%s681 + $0x14] sm:$0x1]
        %v1066 = vld [vmem:[%s681 + $0x18] sm:$0xe]
        %v1067 = vld [vmem:[%s681 + $0x1c] sm:$0xf]
        %v1068 = vld [vmem:[%s681 + $0x20] sm:$0x1]
        %v1069 = vld [vmem:[%s681 + $0x24] sm:$0xe]
        %v1070 = vld [vmem:[%s681 + $0x28] sm:$0xf]
        %v1071 = vld [vmem:[%s681 + $0x2c] sm:$0x1]
        %v1072 = vld [vmem:[%s681 + $0x30] sm:$0xe]
        %v1073 = vld [vmem:[%s681 + $0x34] sm:$0xf]
        %v1074 = vld [vmem:[%s681 + $0x38] sm:$0x1]
        %v1075 = vld [vmem:[%s681 + $0x3c] sm:$0xe]
        %v1076 = vld [vmem:[%s681 + $0x40] sm:$0xf]
        %v1077 = vld [vmem:[%s681 + $0x44] sm:$0x1]
        %v1078 = vld [vmem:[%s681 + $0x48] sm:$0xe]
        %v1079 = vld [vmem:[%s681 + $0x4c] sm:$0xf]
        %v1080 = vld [vmem:[%s681 + $0x50] sm:$0x1]
        %v1081 = vld [vmem:[%s681 + $0x54] sm:$0xe]
        %v1082 = vld [vmem:[%s681 + $0x58] sm:$0xf]
        %v1083 = vld [vmem:[%s681 + $0x5c] sm:$0x1]
        %v1108 = vrot.slane %v1060, 5
        %v1109 = vrot.slane %v1108, 4
        %v1110 = vrot.slane %v1061, 5
        %v1111 = vsel %vm556, %v1109, %v1110
        %v1112 = vrot.slane %v1110, 4
        %v1113 = vrot.slane %v1062, 5
        %v1114 = vsel %vm556, %v1112, %v1113
        %v1115 = vrot.slane %v1063, 5
        %v1116 = vrot.slane %v1115, 4
        %v1117 = vrot.slane %v1064, 5
        %v1118 = vsel %vm556, %v1116, %v1117
        %v1119 = vrot.slane %v1117, 4
        %v1120 = vrot.slane %v1065, 5
        %v1121 = vsel %vm556, %v1119, %v1120
        %v1122 = vrot.slane %v1066, 5
        %v1123 = vrot.slane %v1122, 4
        %v1124 = vrot.slane %v1067, 5
        %v1125 = vsel %vm556, %v1123, %v1124
        %v1126 = vrot.slane %v1124, 4
        %v1127 = vrot.slane %v1068, 5
        %v1128 = vsel %vm556, %v1126, %v1127
        %v1129 = vrot.slane %v1069, 5
        %v1130 = vrot.slane %v1129, 4
        %v1131 = vrot.slane %v1070, 5
        %v1132 = vsel %vm556, %v1130, %v1131
        %v1133 = vrot.slane %v1131, 4
        %v1134 = vrot.slane %v1071, 5
        %v1135 = vsel %vm556, %v1133, %v1134
        %v1136 = vrot.slane %v1072, 5
        %v1137 = vrot.slane %v1136, 4
        %v1138 = vrot.slane %v1073, 5
        %v1139 = vsel %vm556, %v1137, %v1138
        %v1140 = vrot.slane %v1138, 4
        %v1141 = vrot.slane %v1074, 5
        %v1142 = vsel %vm556, %v1140, %v1141
        %v1143 = vrot.slane %v1075, 5
        %v1144 = vrot.slane %v1143, 4
        %v1145 = vrot.slane %v1076, 5
        %v1146 = vsel %vm556, %v1144, %v1145
        %v1147 = vrot.slane %v1145, 4
        %v1148 = vrot.slane %v1077, 5
        %v1149 = vsel %vm556, %v1147, %v1148
        %v1150 = vrot.slane %v1078, 5
        %v1151 = vrot.slane %v1150, 4
        %v1152 = vrot.slane %v1079, 5
        %v1153 = vsel %vm556, %v1151, %v1152
        %v1154 = vrot.slane %v1152, 4
        %v1155 = vrot.slane %v1080, 5
        %v1156 = vsel %vm556, %v1154, %v1155
        %v1157 = vrot.slane %v1081, 5
        %v1158 = vrot.slane %v1157, 4
        %v1159 = vrot.slane %v1082, 5
        %v1160 = vsel %vm556, %v1158, %v1159
        %v1161 = vrot.slane %v1159, 4
        %v1162 = vrot.slane %v1083, 5
        %v1163 = vsel %vm556, %v1161, %v1162
        %1164 = vrot.lane.b32.xlu0 %v1111, 40
        %v1165 = vpop.permute.xlu0 %1164
        %1166 = vrot.lane.b32.xlu0 %v1114, 40
        %v1167 = vpop.permute.xlu0 %1166
        %1168 = vrot.lane.b32.xlu0 %v1118, 40
        %v1169 = vpop.permute.xlu0 %1168
        %1170 = vrot.lane.b32.xlu0 %v1121, 40
        %v1171 = vpop.permute.xlu0 %1170
        %1172 = vrot.lane.b32.xlu0 %v1125, 40
        %v1173 = vpop.permute.xlu0 %1172
        %1174 = vrot.lane.b32.xlu0 %v1128, 40
        %v1175 = vpop.permute.xlu0 %1174
        %1176 = vrot.lane.b32.xlu0 %v1132, 40
        %v1177 = vpop.permute.xlu0 %1176
        %1178 = vrot.lane.b32.xlu0 %v1135, 40
        %v1179 = vpop.permute.xlu0 %1178
        %1180 = vrot.lane.b32.xlu0 %v1139, 40
        %v1181 = vpop.permute.xlu0 %1180
        %1182 = vrot.lane.b32.xlu0 %v1142, 40
        %v1183 = vpop.permute.xlu0 %1182
        %1184 = vrot.lane.b32.xlu0 %v1146, 40
        %v1185 = vpop.permute.xlu0 %1184
        %1186 = vrot.lane.b32.xlu0 %v1149, 40
        %v1187 = vpop.permute.xlu0 %1186
        %1188 = vrot.lane.b32.xlu0 %v1153, 40
        %v1189 = vpop.permute.xlu0 %1188
        %1190 = vrot.lane.b32.xlu0 %v1156, 40
        %v1191 = vpop.permute.xlu0 %1190
        %1192 = vrot.lane.b32.xlu0 %v1160, 40
        %v1193 = vpop.permute.xlu0 %1192
        %1194 = vrot.lane.b32.xlu0 %v1163, 40
        %v1195 = vpop.permute.xlu0 %1194
        %vm1212 = vcmask 388416
        %1213 = vst.msk [vmem:[#allocation2] sm:$0xf] %vm1212, %v1165
        %1214 = vst.msk [vmem:[#allocation2 + $0x4] sm:$0xf] %vm1212, %v1167
        %1215 = vst.msk [vmem:[#allocation2 + $0x8] sm:$0xf] %vm1212, %v1169
        %1216 = vst.msk [vmem:[#allocation2 + $0xc] sm:$0xf] %vm1212, %v1171
        %1217 = vst.msk [vmem:[#allocation2 + $0x10] sm:$0xf] %vm1212, %v1173
        %1218 = vst.msk [vmem:[#allocation2 + $0x14] sm:$0xf] %vm1212, %v1175
        %1219 = vst.msk [vmem:[#allocation2 + $0x18] sm:$0xf] %vm1212, %v1177
        %1220 = vst.msk [vmem:[#allocation2 + $0x1c] sm:$0xf] %vm1212, %v1179
        %1221 = vst.msk [vmem:[#allocation2 + $0x20] sm:$0xf] %vm1212, %v1181
        %1222 = vst.msk [vmem:[#allocation2 + $0x24] sm:$0xf] %vm1212, %v1183
        %1223 = vst.msk [vmem:[#allocation2 + $0x28] sm:$0xf] %vm1212, %v1185
        %1224 = vst.msk [vmem:[#allocation2 + $0x2c] sm:$0xf] %vm1212, %v1187
        %1225 = vst.msk [vmem:[#allocation2 + $0x30] sm:$0xf] %vm1212, %v1189
        %1226 = vst.msk [vmem:[#allocation2 + $0x34] sm:$0xf] %vm1212, %v1191
        %1227 = vst.msk [vmem:[#allocation2 + $0x38] sm:$0xf] %vm1212, %v1193
        %1228 = vst.msk [vmem:[#allocation2 + $0x3c] sm:$0xf] %vm1212, %v1195
        %s1229 = sadd.s32 %s185, 2
        %s1230 = smul.u32 %s1229, 3
        %s1231 = smul.addr %s1230, 4
        %s1232 = scalar_lea.vmem %s182, %s1231
        %v1233 = vld [vmem:[%s1232] sm:$0xf]
        %v1234 = vld [vmem:[%s1232 + $0x4] sm:$0xf]
        %v1235 = vld [vmem:[%s1232 + $0xc] sm:$0xf]
        %v1236 = vld [vmem:[%s1232 + $0x10] sm:$0xf]
        %v1237 = vld [vmem:[%s1232 + $0x18] sm:$0xf]
        %v1238 = vld [vmem:[%s1232 + $0x1c] sm:$0xf]
        %v1239 = vld [vmem:[%s1232 + $0x24] sm:$0xf]
        %v1240 = vld [vmem:[%s1232 + $0x28] sm:$0xf]
        %v1241 = vld [vmem:[%s1232 + $0x30] sm:$0xf]
        %v1242 = vld [vmem:[%s1232 + $0x34] sm:$0xf]
        %v1243 = vld [vmem:[%s1232 + $0x3c] sm:$0xf]
        %v1244 = vld [vmem:[%s1232 + $0x40] sm:$0xf]
        %v1245 = vld [vmem:[%s1232 + $0x48] sm:$0xf]
        %v1246 = vld [vmem:[%s1232 + $0x4c] sm:$0xf]
        %v1247 = vld [vmem:[%s1232 + $0x54] sm:$0xf]
        %v1248 = vld [vmem:[%s1232 + $0x58] sm:$0xf]
        %1265 = vrot.lane.b32.xlu0 %v1233, 48
        %v1266 = vpop.permute.xlu0 %1265
        %1267 = vrot.lane.b32.xlu0 %v1234, 48
        %v1268 = vpop.permute.xlu0 %1267
        %1269 = vrot.lane.b32.xlu0 %v1235, 48
        %v1270 = vpop.permute.xlu0 %1269
        %1271 = vrot.lane.b32.xlu0 %v1236, 48
        %v1272 = vpop.permute.xlu0 %1271
        %1273 = vrot.lane.b32.xlu0 %v1237, 48
        %v1274 = vpop.permute.xlu0 %1273
        %1275 = vrot.lane.b32.xlu0 %v1238, 48
        %v1276 = vpop.permute.xlu0 %1275
        %1277 = vrot.lane.b32.xlu0 %v1239, 48
        %v1278 = vpop.permute.xlu0 %1277
        %1279 = vrot.lane.b32.xlu0 %v1240, 48
        %v1280 = vpop.permute.xlu0 %1279
        %1281 = vrot.lane.b32.xlu0 %v1241, 48
        %v1282 = vpop.permute.xlu0 %1281
        %1283 = vrot.lane.b32.xlu0 %v1242, 48
        %v1284 = vpop.permute.xlu0 %1283
        %1285 = vrot.lane.b32.xlu0 %v1243, 48
        %v1286 = vpop.permute.xlu0 %1285
        %1287 = vrot.lane.b32.xlu0 %v1244, 48
        %v1288 = vpop.permute.xlu0 %1287
        %1289 = vrot.lane.b32.xlu0 %v1245, 48
        %v1290 = vpop.permute.xlu0 %1289
        %1291 = vrot.lane.b32.xlu0 %v1246, 48
        %v1292 = vpop.permute.xlu0 %1291
        %1293 = vrot.lane.b32.xlu0 %v1247, 48
        %v1294 = vpop.permute.xlu0 %1293
        %1295 = vrot.lane.b32.xlu0 %v1248, 48
        %v1296 = vpop.permute.xlu0 %1295
        %vm1313 = vcmask 454016
        %1314 = vst.msk [vmem:[#allocation2] sm:$0xf] %vm1313, %v1266
        %1315 = vst.msk [vmem:[#allocation2 + $0x4] sm:$0xf] %vm1313, %v1268
        %1316 = vst.msk [vmem:[#allocation2 + $0x8] sm:$0xf] %vm1313, %v1270
        %1317 = vst.msk [vmem:[#allocation2 + $0xc] sm:$0xf] %vm1313, %v1272
        %1318 = vst.msk [vmem:[#allocation2 + $0x10] sm:$0xf] %vm1313, %v1274
        %1319 = vst.msk [vmem:[#allocation2 + $0x14] sm:$0xf] %vm1313, %v1276
        %1320 = vst.msk [vmem:[#allocation2 + $0x18] sm:$0xf] %vm1313, %v1278
        %1321 = vst.msk [vmem:[#allocation2 + $0x1c] sm:$0xf] %vm1313, %v1280
        %1322 = vst.msk [vmem:[#allocation2 + $0x20] sm:$0xf] %vm1313, %v1282
        %1323 = vst.msk [vmem:[#allocation2 + $0x24] sm:$0xf] %vm1313, %v1284
        %1324 = vst.msk [vmem:[#allocation2 + $0x28] sm:$0xf] %vm1313, %v1286
        %1325 = vst.msk [vmem:[#allocation2 + $0x2c] sm:$0xf] %vm1313, %v1288
        %1326 = vst.msk [vmem:[#allocation2 + $0x30] sm:$0xf] %vm1313, %v1290
        %1327 = vst.msk [vmem:[#allocation2 + $0x34] sm:$0xf] %vm1313, %v1292
        %1328 = vst.msk [vmem:[#allocation2 + $0x38] sm:$0xf] %vm1313, %v1294
        %1329 = vst.msk [vmem:[#allocation2 + $0x3c] sm:$0xf] %vm1313, %v1296
        %v1330 = vld [vmem:[%s1232] sm:$0xf]
        %v1331 = vld [vmem:[%s1232 + $0x4] sm:$0xf]
        %v1332 = vld [vmem:[%s1232 + $0x8] sm:$0x1]
        %v1333 = vld [vmem:[%s1232 + $0xc] sm:$0xf]
        %v1334 = vld [vmem:[%s1232 + $0x10] sm:$0xf]
        %v1335 = vld [vmem:[%s1232 + $0x14] sm:$0x1]
        %v1336 = vld [vmem:[%s1232 + $0x18] sm:$0xf]
        %v1337 = vld [vmem:[%s1232 + $0x1c] sm:$0xf]
        %v1338 = vld [vmem:[%s1232 + $0x20] sm:$0x1]
        %v1339 = vld [vmem:[%s1232 + $0x24] sm:$0xf]
        %v1340 = vld [vmem:[%s1232 + $0x28] sm:$0xf]
        %v1341 = vld [vmem:[%s1232 + $0x2c] sm:$0x1]
        %v1342 = vld [vmem:[%s1232 + $0x30] sm:$0xf]
        %v1343 = vld [vmem:[%s1232 + $0x34] sm:$0xf]
        %v1344 = vld [vmem:[%s1232 + $0x38] sm:$0x1]
        %v1345 = vld [vmem:[%s1232 + $0x3c] sm:$0xf]
        %v1346 = vld [vmem:[%s1232 + $0x40] sm:$0xf]
        %v1347 = vld [vmem:[%s1232 + $0x44] sm:$0x1]
        %v1348 = vld [vmem:[%s1232 + $0x48] sm:$0xf]
        %v1349 = vld [vmem:[%s1232 + $0x4c] sm:$0xf]
        %v1350 = vld [vmem:[%s1232 + $0x50] sm:$0x1]
        %v1351 = vld [vmem:[%s1232 + $0x54] sm:$0xf]
        %v1352 = vld [vmem:[%s1232 + $0x58] sm:$0xf]
        %v1353 = vld [vmem:[%s1232 + $0x5c] sm:$0x1]
        %v1355 = vshrl.u32 %v1330, 16
        %v1357 = vrot.slane %v1355, 4
        %v1358 = vshll.u32 %v1330, 16
        %v1360 = vrot.slane %v1358, 5
        %v1361 = vor.u32 %v1357, %v1360
        %v1362 = vrot.slane %v1361, 4
        %v1364 = vshll.u32 %v1331, 16
        %v1366 = vrot.slane %v1364, 5
        %v1367 = vsel %vm248, %v1362, %v1366
        %v1368 = vshrl.u32 %v1331, 16
        %v1370 = vrot.slane %v1368, 4
        %v1371 = vor.u32 %v1370, %v1366
        %v1372 = vrot.slane %v1371, 4
        %v1374 = vshll.u32 %v1332, 16
        %v1376 = vrot.slane %v1374, 5
        %v1377 = vsel %vm248, %v1372, %v1376
        %v1379 = vshrl.u32 %v1333, 16
        %v1381 = vrot.slane %v1379, 4
        %v1382 = vshll.u32 %v1333, 16
        %v1384 = vrot.slane %v1382, 5
        %v1385 = vor.u32 %v1381, %v1384
        %v1386 = vrot.slane %v1385, 4
        %v1388 = vshll.u32 %v1334, 16
        %v1390 = vrot.slane %v1388, 5
        %v1391 = vsel %vm248, %v1386, %v1390
        %v1392 = vshrl.u32 %v1334, 16
        %v1394 = vrot.slane %v1392, 4
        %v1395 = vor.u32 %v1394, %v1390
        %v1396 = vrot.slane %v1395, 4
        %v1398 = vshll.u32 %v1335, 16
        %v1400 = vrot.slane %v1398, 5
        %v1401 = vsel %vm248, %v1396, %v1400
        %v1403 = vshrl.u32 %v1336, 16
        %v1405 = vrot.slane %v1403, 4
        %v1406 = vshll.u32 %v1336, 16
        %v1408 = vrot.slane %v1406, 5
        %v1409 = vor.u32 %v1405, %v1408
        %v1410 = vrot.slane %v1409, 4
        %v1412 = vshll.u32 %v1337, 16
        %v1414 = vrot.slane %v1412, 5
        %v1415 = vsel %vm248, %v1410, %v1414
        %v1416 = vshrl.u32 %v1337, 16
        %v1418 = vrot.slane %v1416, 4
        %v1419 = vor.u32 %v1418, %v1414
        %v1420 = vrot.slane %v1419, 4
        %v1422 = vshll.u32 %v1338, 16
        %v1424 = vrot.slane %v1422, 5
        %v1425 = vsel %vm248, %v1420, %v1424
        %v1427 = vshrl.u32 %v1339, 16
        %v1429 = vrot.slane %v1427, 4
        %v1430 = vshll.u32 %v1339, 16
        %v1432 = vrot.slane %v1430, 5
        %v1433 = vor.u32 %v1429, %v1432
        %v1434 = vrot.slane %v1433, 4
        %v1436 = vshll.u32 %v1340, 16
        %v1438 = vrot.slane %v1436, 5
        %v1439 = vsel %vm248, %v1434, %v1438
        %v1440 = vshrl.u32 %v1340, 16
        %v1442 = vrot.slane %v1440, 4
        %v1443 = vor.u32 %v1442, %v1438
        %v1444 = vrot.slane %v1443, 4
        %v1446 = vshll.u32 %v1341, 16
        %v1448 = vrot.slane %v1446, 5
        %v1449 = vsel %vm248, %v1444, %v1448
        %v1451 = vshrl.u32 %v1342, 16
        %v1453 = vrot.slane %v1451, 4
        %v1454 = vshll.u32 %v1342, 16
        %v1456 = vrot.slane %v1454, 5
        %v1457 = vor.u32 %v1453, %v1456
        %v1458 = vrot.slane %v1457, 4
        %v1460 = vshll.u32 %v1343, 16
        %v1462 = vrot.slane %v1460, 5
        %v1463 = vsel %vm248, %v1458, %v1462
        %v1464 = vshrl.u32 %v1343, 16
        %v1466 = vrot.slane %v1464, 4
        %v1467 = vor.u32 %v1466, %v1462
        %v1468 = vrot.slane %v1467, 4
        %v1470 = vshll.u32 %v1344, 16
        %v1472 = vrot.slane %v1470, 5
        %v1473 = vsel %vm248, %v1468, %v1472
        %v1475 = vshrl.u32 %v1345, 16
        %v1477 = vrot.slane %v1475, 4
        %v1478 = vshll.u32 %v1345, 16
        %v1480 = vrot.slane %v1478, 5
        %v1481 = vor.u32 %v1477, %v1480
        %v1482 = vrot.slane %v1481, 4
        %v1484 = vshll.u32 %v1346, 16
        %v1486 = vrot.slane %v1484, 5
        %v1487 = vsel %vm248, %v1482, %v1486
        %v1488 = vshrl.u32 %v1346, 16
        %v1490 = vrot.slane %v1488, 4
        %v1491 = vor.u32 %v1490, %v1486
        %v1492 = vrot.slane %v1491, 4
        %v1494 = vshll.u32 %v1347, 16
        %v1496 = vrot.slane %v1494, 5
        %v1497 = vsel %vm248, %v1492, %v1496
        %v1499 = vshrl.u32 %v1348, 16
        %v1501 = vrot.slane %v1499, 4
        %v1502 = vshll.u32 %v1348, 16
        %v1504 = vrot.slane %v1502, 5
        %v1505 = vor.u32 %v1501, %v1504
        %v1506 = vrot.slane %v1505, 4
        %v1508 = vshll.u32 %v1349, 16
        %v1510 = vrot.slane %v1508, 5
        %v1511 = vsel %vm248, %v1506, %v1510
        %v1512 = vshrl.u32 %v1349, 16
        %v1514 = vrot.slane %v1512, 4
        %v1515 = vor.u32 %v1514, %v1510
        %v1516 = vrot.slane %v1515, 4
        %v1518 = vshll.u32 %v1350, 16
        %v1520 = vrot.slane %v1518, 5
        %v1521 = vsel %vm248, %v1516, %v1520
        %v1523 = vshrl.u32 %v1351, 16
        %v1525 = vrot.slane %v1523, 4
        %v1526 = vshll.u32 %v1351, 16
        %v1528 = vrot.slane %v1526, 5
        %v1529 = vor.u32 %v1525, %v1528
        %v1530 = vrot.slane %v1529, 4
        %v1532 = vshll.u32 %v1352, 16
        %v1534 = vrot.slane %v1532, 5
        %v1535 = vsel %vm248, %v1530, %v1534
        %v1536 = vshrl.u32 %v1352, 16
        %v1538 = vrot.slane %v1536, 4
        %v1539 = vor.u32 %v1538, %v1534
        %v1540 = vrot.slane %v1539, 4
        %v1542 = vshll.u32 %v1353, 16
        %v1544 = vrot.slane %v1542, 5
        %v1545 = vsel %vm248, %v1540, %v1544
        %1546 = vrot.lane.b32.xlu0 %v1367, 56
        %v1547 = vpop.permute.xlu0 %1546
        %1548 = vrot.lane.b32.xlu0 %v1377, 56
        %v1549 = vpop.permute.xlu0 %1548
        %1550 = vrot.lane.b32.xlu0 %v1391, 56
        %v1551 = vpop.permute.xlu0 %1550
        %1552 = vrot.lane.b32.xlu0 %v1401, 56
        %v1553 = vpop.permute.xlu0 %1552
        %1554 = vrot.lane.b32.xlu0 %v1415, 56
        %v1555 = vpop.permute.xlu0 %1554
        %1556 = vrot.lane.b32.xlu0 %v1425, 56
        %v1557 = vpop.permute.xlu0 %1556
        %1558 = vrot.lane.b32.xlu0 %v1439, 56
        %v1559 = vpop.permute.xlu0 %1558
        %1560 = vrot.lane.b32.xlu0 %v1449, 56
        %v1561 = vpop.permute.xlu0 %1560
        %1562 = vrot.lane.b32.xlu0 %v1463, 56
        %v1563 = vpop.permute.xlu0 %1562
        %1564 = vrot.lane.b32.xlu0 %v1473, 56
        %v1565 = vpop.permute.xlu0 %1564
        %1566 = vrot.lane.b32.xlu0 %v1487, 56
        %v1567 = vpop.permute.xlu0 %1566
        %1568 = vrot.lane.b32.xlu0 %v1497, 56
        %v1569 = vpop.permute.xlu0 %1568
        %1570 = vrot.lane.b32.xlu0 %v1511, 56
        %v1571 = vpop.permute.xlu0 %1570
        %1572 = vrot.lane.b32.xlu0 %v1521, 56
        %v1573 = vpop.permute.xlu0 %1572
        %1574 = vrot.lane.b32.xlu0 %v1535, 56
        %v1575 = vpop.permute.xlu0 %1574
        %1576 = vrot.lane.b32.xlu0 %v1545, 56
        %v1577 = vpop.permute.xlu0 %1576
        %vm1594 = vcmask 519616
        %1595 = vst.msk [vmem:[#allocation2] sm:$0xf] %vm1594, %v1547
        %1596 = vst.msk [vmem:[#allocation2 + $0x4] sm:$0xf] %vm1594, %v1549
        %1597 = vst.msk [vmem:[#allocation2 + $0x8] sm:$0xf] %vm1594, %v1551
        %1598 = vst.msk [vmem:[#allocation2 + $0xc] sm:$0xf] %vm1594, %v1553
        %1599 = vst.msk [vmem:[#allocation2 + $0x10] sm:$0xf] %vm1594, %v1555
        %1600 = vst.msk [vmem:[#allocation2 + $0x14] sm:$0xf] %vm1594, %v1557
        %1601 = vst.msk [vmem:[#allocation2 + $0x18] sm:$0xf] %vm1594, %v1559
        %1602 = vst.msk [vmem:[#allocation2 + $0x1c] sm:$0xf] %vm1594, %v1561
        %1603 = vst.msk [vmem:[#allocation2 + $0x20] sm:$0xf] %vm1594, %v1563
        %1604 = vst.msk [vmem:[#allocation2 + $0x24] sm:$0xf] %vm1594, %v1565
        %1605 = vst.msk [vmem:[#allocation2 + $0x28] sm:$0xf] %vm1594, %v1567
        %1606 = vst.msk [vmem:[#allocation2 + $0x2c] sm:$0xf] %vm1594, %v1569
        %1607 = vst.msk [vmem:[#allocation2 + $0x30] sm:$0xf] %vm1594, %v1571
        %1608 = vst.msk [vmem:[#allocation2 + $0x34] sm:$0xf] %vm1594, %v1573
        %1609 = vst.msk [vmem:[#allocation2 + $0x38] sm:$0xf] %vm1594, %v1575
        %1610 = vst.msk [vmem:[#allocation2 + $0x3c] sm:$0xf] %vm1594, %v1577
        %v1611 = vld [vmem:[%s1232] sm:$0xe]
        %v1612 = vld [vmem:[%s1232 + $0x4] sm:$0xf]
        %v1613 = vld [vmem:[%s1232 + $0x8] sm:$0x1]
        %v1614 = vld [vmem:[%s1232 + $0xc] sm:$0xe]
        %v1615 = vld [vmem:[%s1232 + $0x10] sm:$0xf]
        %v1616 = vld [vmem:[%s1232 + $0x14] sm:$0x1]
        %v1617 = vld [vmem:[%s1232 + $0x18] sm:$0xe]
        %v1618 = vld [vmem:[%s1232 + $0x1c] sm:$0xf]
        %v1619 = vld [vmem:[%s1232 + $0x20] sm:$0x1]
        %v1620 = vld [vmem:[%s1232 + $0x24] sm:$0xe]
        %v1621 = vld [vmem:[%s1232 + $0x28] sm:$0xf]
        %v1622 = vld [vmem:[%s1232 + $0x2c] sm:$0x1]
        %v1623 = vld [vmem:[%s1232 + $0x30] sm:$0xe]
        %v1624 = vld [vmem:[%s1232 + $0x34] sm:$0xf]
        %v1625 = vld [vmem:[%s1232 + $0x38] sm:$0x1]
        %v1626 = vld [vmem:[%s1232 + $0x3c] sm:$0xe]
        %v1627 = vld [vmem:[%s1232 + $0x40] sm:$0xf]
        %v1628 = vld [vmem:[%s1232 + $0x44] sm:$0x1]
        %v1629 = vld [vmem:[%s1232 + $0x48] sm:$0xe]
        %v1630 = vld [vmem:[%s1232 + $0x4c] sm:$0xf]
        %v1631 = vld [vmem:[%s1232 + $0x50] sm:$0x1]
        %v1632 = vld [vmem:[%s1232 + $0x54] sm:$0xe]
        %v1633 = vld [vmem:[%s1232 + $0x58] sm:$0xf]
        %v1634 = vld [vmem:[%s1232 + $0x5c] sm:$0x1]
        %v1659 = vrot.slane %v1611, 5
        %v1660 = vrot.slane %v1659, 4
        %v1661 = vrot.slane %v1612, 5
        %v1662 = vsel %vm556, %v1660, %v1661
        %v1663 = vrot.slane %v1661, 4
        %v1664 = vrot.slane %v1613, 5
        %v1665 = vsel %vm556, %v1663, %v1664
        %v1666 = vrot.slane %v1614, 5
        %v1667 = vrot.slane %v1666, 4
        %v1668 = vrot.slane %v1615, 5
        %v1669 = vsel %vm556, %v1667, %v1668
        %v1670 = vrot.slane %v1668, 4
        %v1671 = vrot.slane %v1616, 5
        %v1672 = vsel %vm556, %v1670, %v1671
        %v1673 = vrot.slane %v1617, 5
        %v1674 = vrot.slane %v1673, 4
        %v1675 = vrot.slane %v1618, 5
        %v1676 = vsel %vm556, %v1674, %v1675
        %v1677 = vrot.slane %v1675, 4
        %v1678 = vrot.slane %v1619, 5
        %v1679 = vsel %vm556, %v1677, %v1678
        %v1680 = vrot.slane %v1620, 5
        %v1681 = vrot.slane %v1680, 4
        %v1682 = vrot.slane %v1621, 5
        %v1683 = vsel %vm556, %v1681, %v1682
        %v1684 = vrot.slane %v1682, 4
        %v1685 = vrot.slane %v1622, 5
        %v1686 = vsel %vm556, %v1684, %v1685
        %v1687 = vrot.slane %v1623, 5
        %v1688 = vrot.slane %v1687, 4
        %v1689 = vrot.slane %v1624, 5
        %v1690 = vsel %vm556, %v1688, %v1689
        %v1691 = vrot.slane %v1689, 4
        %v1692 = vrot.slane %v1625, 5
        %v1693 = vsel %vm556, %v1691, %v1692
        %v1694 = vrot.slane %v1626, 5
        %v1695 = vrot.slane %v1694, 4
        %v1696 = vrot.slane %v1627, 5
        %v1697 = vsel %vm556, %v1695, %v1696
        %v1698 = vrot.slane %v1696, 4
        %v1699 = vrot.slane %v1628, 5
        %v1700 = vsel %vm556, %v1698, %v1699
        %v1701 = vrot.slane %v1629, 5
        %v1702 = vrot.slane %v1701, 4
        %v1703 = vrot.slane %v1630, 5
        %v1704 = vsel %vm556, %v1702, %v1703
        %v1705 = vrot.slane %v1703, 4
        %v1706 = vrot.slane %v1631, 5
        %v1707 = vsel %vm556, %v1705, %v1706
        %v1708 = vrot.slane %v1632, 5
        %v1709 = vrot.slane %v1708, 4
        %v1710 = vrot.slane %v1633, 5
        %v1711 = vsel %vm556, %v1709, %v1710
        %v1712 = vrot.slane %v1710, 4
        %v1713 = vrot.slane %v1634, 5
        %v1714 = vsel %vm556, %v1712, %v1713
        %1715 = vrot.lane.b32.xlu0 %v1662, 64
        %v1716 = vpop.permute.xlu0 %1715
        %1717 = vrot.lane.b32.xlu0 %v1665, 64
        %v1718 = vpop.permute.xlu0 %1717
        %1719 = vrot.lane.b32.xlu0 %v1669, 64
        %v1720 = vpop.permute.xlu0 %1719
        %1721 = vrot.lane.b32.xlu0 %v1672, 64
        %v1722 = vpop.permute.xlu0 %1721
        %1723 = vrot.lane.b32.xlu0 %v1676, 64
        %v1724 = vpop.permute.xlu0 %1723
        %1725 = vrot.lane.b32.xlu0 %v1679, 64
        %v1726 = vpop.permute.xlu0 %1725
        %1727 = vrot.lane.b32.xlu0 %v1683, 64
        %v1728 = vpop.permute.xlu0 %1727
        %1729 = vrot.lane.b32.xlu0 %v1686, 64
        %v1730 = vpop.permute.xlu0 %1729
        %1731 = vrot.lane.b32.xlu0 %v1690, 64
        %v1732 = vpop.permute.xlu0 %1731
        %1733 = vrot.lane.b32.xlu0 %v1693, 64
        %v1734 = vpop.permute.xlu0 %1733
        %1735 = vrot.lane.b32.xlu0 %v1697, 64
        %v1736 = vpop.permute.xlu0 %1735
        %1737 = vrot.lane.b32.xlu0 %v1700, 64
        %v1738 = vpop.permute.xlu0 %1737
        %1739 = vrot.lane.b32.xlu0 %v1704, 64
        %v1740 = vpop.permute.xlu0 %1739
        %1741 = vrot.lane.b32.xlu0 %v1707, 64
        %v1742 = vpop.permute.xlu0 %1741
        %1743 = vrot.lane.b32.xlu0 %v1711, 64
        %v1744 = vpop.permute.xlu0 %1743
        %1745 = vrot.lane.b32.xlu0 %v1714, 64
        %v1746 = vpop.permute.xlu0 %1745
        %vm1763 = vcmask 585216
        %1764 = vst.msk [vmem:[#allocation2] sm:$0xf] %vm1763, %v1716
        %1765 = vst.msk [vmem:[#allocation2 + $0x4] sm:$0xf] %vm1763, %v1718
        %1766 = vst.msk [vmem:[#allocation2 + $0x8] sm:$0xf] %vm1763, %v1720
        %1767 = vst.msk [vmem:[#allocation2 + $0xc] sm:$0xf] %vm1763, %v1722
        %1768 = vst.msk [vmem:[#allocation2 + $0x10] sm:$0xf] %vm1763, %v1724
        %1769 = vst.msk [vmem:[#allocation2 + $0x14] sm:$0xf] %vm1763, %v1726
        %1770 = vst.msk [vmem:[#allocation2 + $0x18] sm:$0xf] %vm1763, %v1728
        %1771 = vst.msk [vmem:[#allocation2 + $0x1c] sm:$0xf] %vm1763, %v1730
        %1772 = vst.msk [vmem:[#allocation2 + $0x20] sm:$0xf] %vm1763, %v1732
        %1773 = vst.msk [vmem:[#allocation2 + $0x24] sm:$0xf] %vm1763, %v1734
        %1774 = vst.msk [vmem:[#allocation2 + $0x28] sm:$0xf] %vm1763, %v1736
        %1775 = vst.msk [vmem:[#allocation2 + $0x2c] sm:$0xf] %vm1763, %v1738
        %1776 = vst.msk [vmem:[#allocation2 + $0x30] sm:$0xf] %vm1763, %v1740
        %1777 = vst.msk [vmem:[#allocation2 + $0x34] sm:$0xf] %vm1763, %v1742
        %1778 = vst.msk [vmem:[#allocation2 + $0x38] sm:$0xf] %vm1763, %v1744
        %1779 = vst.msk [vmem:[#allocation2 + $0x3c] sm:$0xf] %vm1763, %v1746
        %v1780 = vld [vmem:[#allocation2] sm:$0xf]
        %v1781 = vld [vmem:[#allocation2 + $0x4] sm:$0xf]
        %v1782 = vld [vmem:[#allocation2 + $0x8] sm:$0xf]
        %v1783 = vld [vmem:[#allocation2 + $0xc] sm:$0xf]
        %v1784 = vld [vmem:[#allocation2 + $0x10] sm:$0xf]
        %v1785 = vld [vmem:[#allocation2 + $0x14] sm:$0xf]
        %v1786 = vld [vmem:[#allocation2 + $0x18] sm:$0xf]
        %v1787 = vld [vmem:[#allocation2 + $0x1c] sm:$0xf]
        %v1788 = vld [vmem:[#allocation2 + $0x20] sm:$0xf]
        %v1789 = vld [vmem:[#allocation2 + $0x24] sm:$0xf]
        %v1790 = vld [vmem:[#allocation2 + $0x28] sm:$0xf]
        %v1791 = vld [vmem:[#allocation2 + $0x2c] sm:$0xf]
        %v1792 = vld [vmem:[#allocation2 + $0x30] sm:$0xf]
        %v1793 = vld [vmem:[#allocation2 + $0x34] sm:$0xf]
        %v1794 = vld [vmem:[#allocation2 + $0x38] sm:$0xf]
        %v1795 = vld [vmem:[#allocation2 + $0x3c] sm:$0xf]
        %v1796 = vld [vmem:[%s1] sm:$0xf]
        %v1797 = vld [vmem:[%s1 + $0x4] sm:$0xf]
        %v1798 = vld [vmem:[%s1 + $0x8] sm:$0xf]
        %v1799 = vld [vmem:[%s1 + $0xc] sm:$0xf]
        %v1800 = vld [vmem:[%s1 + $0x10] sm:$0xf]
        %v1801 = vld [vmem:[%s1 + $0x14] sm:$0xf]
        %v1802 = vld [vmem:[%s1 + $0x18] sm:$0xf]
        %v1803 = vld [vmem:[%s1 + $0x1c] sm:$0xf]
        %v1804 = vld [vmem:[%s1 + $0x20] sm:$0xf]
        %v1821 = vunpack.c.l.b16 %v1780
        %v1822 = vunpack.c.l.b16 %v1781
        %v1823 = vunpack.c.l.b16 %v1782
        %v1824 = vunpack.c.l.b16 %v1783
        %v1825 = vunpack.c.l.b16 %v1784
        %v1826 = vunpack.c.l.b16 %v1785
        %v1827 = vunpack.c.l.b16 %v1786
        %v1828 = vunpack.c.l.b16 %v1787
        %v1829 = vunpack.c.l.b16 %v1788
        %v1830 = vunpack.c.l.b16 %v1789
        %v1831 = vunpack.c.l.b16 %v1790
        %v1832 = vunpack.c.l.b16 %v1791
        %v1833 = vunpack.c.l.b16 %v1792
        %v1834 = vunpack.c.l.b16 %v1793
        %v1835 = vunpack.c.l.b16 %v1794
        %v1836 = vunpack.c.l.b16 %v1795
        %v1837 = vpack.c.b16 %v1822, %v1821
        %v1838 = vpack.c.b16 %v1824, %v1823
        %v1839 = vpack.c.b16 %v1826, %v1825
        %v1840 = vpack.c.b16 %v1828, %v1827
        %v1841 = vpack.c.b16 %v1830, %v1829
        %v1842 = vpack.c.b16 %v1832, %v1831
        %v1843 = vpack.c.b16 %v1834, %v1833
        %v1844 = vpack.c.b16 %v1836, %v1835
        %v1854 = vunpack.c.l.b16 %v1796
        %v1855 = vunpack.c.l.b16 %v1797
        %v1856 = vunpack.c.l.b16 %v1798
        %v1857 = vunpack.c.l.b16 %v1799
        %v1858 = vunpack.c.l.b16 %v1800
        %v1859 = vunpack.c.l.b16 %v1801
        %v1860 = vunpack.c.l.b16 %v1802
        %v1861 = vunpack.c.l.b16 %v1803
        %v1862 = vunpack.c.l.b16 %v1804
        %v1863 = vpack.c.b16 %v1855, %v1854
        %v1864 = vpack.c.b16 %v1857, %v1856
        %v1865 = vpack.c.b16 %v1859, %v1858
        %v1866 = vpack.c.b16 %v1861, %v1860
        %v1867 = vpack.c.b16 %v1862, %v1862
        %vm1872 = vcmask 588800
        %v1874 = vsel %vm1872, %v1837, 0
        %v1877 = vsel %vm1872, %v1838, 0
        %v1880 = vsel %vm1872, %v1839, 0
        %v1883 = vsel %vm1872, %v1840, 0
        %v1886 = vsel %vm1872, %v1841, 0
        %v1889 = vsel %vm1872, %v1842, 0
        %v1892 = vsel %vm1872, %v1843, 0
        %v1895 = vsel %vm1872, %v1844, 0
        %vm1897 = vcmask 1043456
        %v1899 = vsel %vm1897, %v1867, 0
        %1901 = vmatprep.subr.bf16.mxu0 0
        %1902 = vmatpush1.bf16.msra.mxu0 0
        %1903 = vmatprep.subr.bf16.mxu0 0
        %1904 = vmatpush1.bf16.msra.mxu0 0
        %1905 = vmatprep.subr.bf16.mxu0 0
        %1906 = vmatpush1.bf16.msra.mxu0 0
        %1907 = vmatprep.subr.bf16.mxu0 0
        %1908 = vmatpush1.bf16.msra.mxu0 %v1899
        %1909 = vmatprep.subr.bf16.mxu0 0
        %1910 = vmatpush1.bf16.msra.mxu0 %v1866
        %1911 = vmatprep.subr.bf16.mxu0 0
        %1912 = vmatpush1.bf16.msra.mxu0 %v1865
        %1913 = vmatprep.subr.bf16.mxu0 0
        %1914 = vmatpush1.bf16.msra.mxu0 %v1864
        %1915 = vmatprep.subr.bf16.mxu0 0
        %1916 = vmatpush1.bf16.msra.mxu0 %v1863
        %1917 = vmatprep.subr.bf16.mxu0 0
        %1918 = vmatpush2.bf16.msra.mxu0 0
        %1919 = vmatprep.subr.bf16.mxu0 0
        %1920 = vmatpush2.bf16.msra.mxu0 0
        %1921 = vmatprep.subr.bf16.mxu0 0
        %1922 = vmatpush2.bf16.msra.mxu0 0
        %1923 = vmatprep.subr.bf16.mxu0 0
        %1924 = vmatpush2.bf16.msra.mxu0 0
        %1925 = vmatprep.subr.bf16.mxu0 0
        %1926 = vmatpush2.bf16.msra.mxu0 0
        %1927 = vmatprep.subr.bf16.mxu0 0
        %1928 = vmatpush2.bf16.msra.mxu0 0
        %1929 = vmatprep.subr.bf16.mxu0 0
        %1930 = vmatpush2.bf16.msra.mxu0 0
        %1931 = vmatprep.subr.bf16.mxu0 0
        %1932 = vmatpush2.bf16.msra.mxu0 0
        %1933 = vmatprep.mubr.bf16.mxu0 0
        %1934 = vmatmul.mubr.bf16.gmra.mxu0 %v1874
        %v1935 = vpop.f32.mrf.mxu0
        %v1936 = vadd.f32 0.0, %v1935
        %v1937 = vpop.f32.mrf.mxu0
        %v1938 = vpop.f32.mrf.mxu0
        %v1939 = vadd.f32 0.0, %v1938
        %v1940 = vpop.f32.mrf.mxu0
        %1941 = vmatprep.mubr.bf16.mxu0 0
        %1942 = vmatmul.mubr.bf16.gmra.mxu0 %v1877
        %v1943 = vpop.f32.mrf.mxu0
        %v1944 = vadd.f32 0.0, %v1943
        %v1945 = vpop.f32.mrf.mxu0
        %v1946 = vpop.f32.mrf.mxu0
        %v1947 = vadd.f32 0.0, %v1946
        %v1948 = vpop.f32.mrf.mxu0
        %1949 = vmatprep.mubr.bf16.mxu0 0
        %1950 = vmatmul.mubr.bf16.gmra.mxu0 %v1880
        %v1951 = vpop.f32.mrf.mxu0
        %v1952 = vadd.f32 0.0, %v1951
        %v1953 = vpop.f32.mrf.mxu0
        %v1954 = vpop.f32.mrf.mxu0
        %v1955 = vadd.f32 0.0, %v1954
        %v1956 = vpop.f32.mrf.mxu0
        %1957 = vmatprep.mubr.bf16.mxu0 0
        %1958 = vmatmul.mubr.bf16.gmra.mxu0 %v1883
        %v1959 = vpop.f32.mrf.mxu0
        %v1960 = vadd.f32 0.0, %v1959
        %v1961 = vpop.f32.mrf.mxu0
        %v1962 = vpop.f32.mrf.mxu0
        %v1963 = vadd.f32 0.0, %v1962
        %v1964 = vpop.f32.mrf.mxu0
        %1965 = vmatprep.mubr.bf16.mxu0 0
        %1966 = vmatmul.mubr.bf16.gmra.mxu0 %v1886
        %v1967 = vpop.f32.mrf.mxu0
        %v1968 = vadd.f32 0.0, %v1967
        %v1969 = vpop.f32.mrf.mxu0
        %v1970 = vpop.f32.mrf.mxu0
        %v1971 = vadd.f32 0.0, %v1970
        %v1972 = vpop.f32.mrf.mxu0
        %1973 = vmatprep.mubr.bf16.mxu0 0
        %1974 = vmatmul.mubr.bf16.gmra.mxu0 %v1889
        %v1975 = vpop.f32.mrf.mxu0
        %v1976 = vadd.f32 0.0, %v1975
        %v1977 = vpop.f32.mrf.mxu0
        %v1978 = vpop.f32.mrf.mxu0
        %v1979 = vadd.f32 0.0, %v1978
        %v1980 = vpop.f32.mrf.mxu0
        %1981 = vmatprep.mubr.bf16.mxu0 0
        %1982 = vmatmul.mubr.bf16.gmra.mxu0 %v1892
        %v1983 = vpop.f32.mrf.mxu0
        %v1984 = vadd.f32 0.0, %v1983
        %v1985 = vpop.f32.mrf.mxu0
        %v1986 = vpop.f32.mrf.mxu0
        %v1987 = vadd.f32 0.0, %v1986
        %v1988 = vpop.f32.mrf.mxu0
        %1989 = vmatprep.mubr.bf16.mxu0 0
        %1990 = vmatmul.mubr.bf16.gmra.mxu0 %v1895
        %v1991 = vpop.f32.mrf.mxu0
        %v1992 = vadd.f32 0.0, %v1991
        %v1993 = vpop.f32.mrf.mxu0
        %v1994 = vpop.f32.mrf.mxu0
        %v1995 = vadd.f32 0.0, %v1994
        %v1996 = vpop.f32.mrf.mxu0
        %1997 = vdwg.mxu0
        %v1998 = vld [vmem:[%s2] sm:$0x1]
        %v1999 = vlaneseq
        %v2000 = vshrl.u32 %v1999, 7
        %v2001 = vsub.s32 0, %v2000
        %v2002 = vrot.slane %v1998, %v2001
        %v2003 = vmul.f32 %v1936, %v2002
        %v2004 = vmul.f32 %v1939, %v2002
        %v2005 = vmul.f32 %v1944, %v2002
        %v2006 = vmul.f32 %v1947, %v2002
        %v2007 = vmul.f32 %v1952, %v2002
        %v2008 = vmul.f32 %v1955, %v2002
        %v2009 = vmul.f32 %v1960, %v2002
        %v2010 = vmul.f32 %v1963, %v2002
        %v2011 = vmul.f32 %v1968, %v2002
        %v2012 = vmul.f32 %v1971, %v2002
        %v2013 = vmul.f32 %v1976, %v2002
        %v2014 = vmul.f32 %v1979, %v2002
        %v2015 = vmul.f32 %v1984, %v2002
        %v2016 = vmul.f32 %v1987, %v2002
        %v2017 = vmul.f32 %v1992, %v2002
        %v2018 = vmul.f32 %v1995, %v2002
        %v2019 = vld [vmem:[%s2 + $0x1] sm:$0x1]
        %v2020 = vlaneseq
        %v2021 = vshrl.u32 %v2020, 7
        %v2022 = vsub.s32 0, %v2021
        %v2023 = vrot.slane %v2019, %v2022
        %v2024 = vadd.f32 %v2003, %v2023
        %v2025 = vadd.f32 %v2004, %v2023
        %v2026 = vadd.f32 %v2005, %v2023
        %v2027 = vadd.f32 %v2006, %v2023
        %v2028 = vadd.f32 %v2007, %v2023
        %v2029 = vadd.f32 %v2008, %v2023
        %v2030 = vadd.f32 %v2009, %v2023
        %v2031 = vadd.f32 %v2010, %v2023
        %v2032 = vadd.f32 %v2011, %v2023
        %v2033 = vadd.f32 %v2012, %v2023
        %v2034 = vadd.f32 %v2013, %v2023
        %v2035 = vadd.f32 %v2014, %v2023
        %v2036 = vadd.f32 %v2015, %v2023
        %v2037 = vadd.f32 %v2016, %v2023
        %v2038 = vadd.f32 %v2017, %v2023
        %v2039 = vadd.f32 %v2018, %v2023
        %v2040 = vsub.f32 0.0, %v2024
        %v2041 = vsub.f32 0.0, %v2025
        %v2042 = vsub.f32 0.0, %v2026
        %v2043 = vsub.f32 0.0, %v2027
        %v2044 = vsub.f32 0.0, %v2028
        %v2045 = vsub.f32 0.0, %v2029
        %v2046 = vsub.f32 0.0, %v2030
        %v2047 = vsub.f32 0.0, %v2031
        %v2048 = vsub.f32 0.0, %v2032
        %v2049 = vsub.f32 0.0, %v2033
        %v2050 = vsub.f32 0.0, %v2034
        %v2051 = vsub.f32 0.0, %v2035
        %v2052 = vsub.f32 0.0, %v2036
        %v2053 = vsub.f32 0.0, %v2037
        %v2054 = vsub.f32 0.0, %v2038
        %v2055 = vsub.f32 0.0, %v2039
        %v2056 = vmul.f32 %v2040, 1.442695
        %v2057 = vpow.pop %v2056
        %v2058 = vmul.f32 %v2041, 1.442695
        %v2059 = vpow.pop %v2058
        %v2060 = vmul.f32 %v2042, 1.442695
        %v2061 = vpow.pop %v2060
        %v2062 = vmul.f32 %v2043, 1.442695
        %v2063 = vpow.pop %v2062
        %v2064 = vmul.f32 %v2044, 1.442695
        %v2065 = vpow.pop %v2064
        %v2066 = vmul.f32 %v2045, 1.442695
        %v2067 = vpow.pop %v2066
        %v2068 = vmul.f32 %v2046, 1.442695
        %v2069 = vpow.pop %v2068
        %v2070 = vmul.f32 %v2047, 1.442695
        %v2071 = vpow.pop %v2070
        %v2072 = vmul.f32 %v2048, 1.442695
        %v2073 = vpow.pop %v2072
        %v2074 = vmul.f32 %v2049, 1.442695
        %v2075 = vpow.pop %v2074
        %v2076 = vmul.f32 %v2050, 1.442695
        %v2077 = vpow.pop %v2076
        %v2078 = vmul.f32 %v2051, 1.442695
        %v2079 = vpow.pop %v2078
        %v2080 = vmul.f32 %v2052, 1.442695
        %v2081 = vpow.pop %v2080
        %v2082 = vmul.f32 %v2053, 1.442695
        %v2083 = vpow.pop %v2082
        %v2084 = vmul.f32 %v2054, 1.442695
        %v2085 = vpow.pop %v2084
        %v2086 = vmul.f32 %v2055, 1.442695
        %v2087 = vpow.pop %v2086
        %v2088 = vadd.f32 %v2057, 1.0
        %v2089 = vadd.f32 %v2059, 1.0
        %v2090 = vadd.f32 %v2061, 1.0
        %v2091 = vadd.f32 %v2063, 1.0
        %v2092 = vadd.f32 %v2065, 1.0
        %v2093 = vadd.f32 %v2067, 1.0
        %v2094 = vadd.f32 %v2069, 1.0
        %v2095 = vadd.f32 %v2071, 1.0
        %v2096 = vadd.f32 %v2073, 1.0
        %v2097 = vadd.f32 %v2075, 1.0
        %v2098 = vadd.f32 %v2077, 1.0
        %v2099 = vadd.f32 %v2079, 1.0
        %v2100 = vadd.f32 %v2081, 1.0
        %v2101 = vadd.f32 %v2083, 1.0
        %v2102 = vadd.f32 %v2085, 1.0
        %v2103 = vadd.f32 %v2087, 1.0
        %v2104 = vrcp.pop %v2088
        %v2105 = vrcp.pop %v2089
        %v2106 = vrcp.pop %v2090
        %v2107 = vrcp.pop %v2091
        %v2108 = vrcp.pop %v2092
        %v2109 = vrcp.pop %v2093
        %v2110 = vrcp.pop %v2094
        %v2111 = vrcp.pop %v2095
        %v2112 = vrcp.pop %v2096
        %v2113 = vrcp.pop %v2097
        %v2114 = vrcp.pop %v2098
        %v2115 = vrcp.pop %v2099
        %v2116 = vrcp.pop %v2100
        %v2117 = vrcp.pop %v2101
        %v2118 = vrcp.pop %v2102
        %v2119 = vrcp.pop %v2103
        %v2120 = vmul.f32 %v2024, %v2104
        %v2121 = vmul.f32 %v2025, %v2105
        %v2122 = vmul.f32 %v2026, %v2106
        %v2123 = vmul.f32 %v2027, %v2107
        %v2124 = vmul.f32 %v2028, %v2108
        %v2125 = vmul.f32 %v2029, %v2109
        %v2126 = vmul.f32 %v2030, %v2110
        %v2127 = vmul.f32 %v2031, %v2111
        %v2128 = vmul.f32 %v2032, %v2112
        %v2129 = vmul.f32 %v2033, %v2113
        %v2130 = vmul.f32 %v2034, %v2114
        %v2131 = vmul.f32 %v2035, %v2115
        %v2132 = vmul.f32 %v2036, %v2116
        %v2133 = vmul.f32 %v2037, %v2117
        %v2134 = vmul.f32 %v2038, %v2118
        %v2135 = vmul.f32 %v2039, %v2119
        %v2136 = vpack.c.bf16 %v2121, %v2120
        %v2137 = vpack.c.bf16 %v2123, %v2122
        %v2138 = vpack.c.bf16 %v2125, %v2124
        %v2139 = vpack.c.bf16 %v2127, %v2126
        %v2140 = vpack.c.bf16 %v2129, %v2128
        %v2141 = vpack.c.bf16 %v2131, %v2130
        %v2142 = vpack.c.bf16 %v2133, %v2132
        %v2143 = vpack.c.bf16 %v2135, %v2134
        %v2152 = vunpack.c.l.b16 %v2136
        %v2153 = vunpack.c.h.b16 %v2136
        %v2154 = vunpack.c.l.b16 %v2137
        %v2155 = vunpack.c.h.b16 %v2137
        %v2156 = vunpack.c.l.b16 %v2138
        %v2157 = vunpack.c.h.b16 %v2138
        %v2158 = vunpack.c.l.b16 %v2139
        %v2159 = vunpack.c.h.b16 %v2139
        %v2160 = vunpack.c.l.b16 %v2140
        %v2161 = vunpack.c.h.b16 %v2140
        %v2162 = vunpack.c.l.b16 %v2141
        %v2163 = vunpack.c.h.b16 %v2141
        %v2164 = vunpack.c.l.b16 %v2142
        %v2165 = vunpack.c.h.b16 %v2142
        %v2166 = vunpack.c.l.b16 %v2143
        %v2167 = vunpack.c.h.b16 %v2143
        %v2168 = vpack.c.b16 %v2152, %v2152
        %v2169 = vpack.c.b16 %v2153, %v2153
        %v2170 = vpack.c.b16 %v2154, %v2154
        %v2171 = vpack.c.b16 %v2155, %v2155
        %v2172 = vpack.c.b16 %v2156, %v2156
        %v2173 = vpack.c.b16 %v2157, %v2157
        %v2174 = vpack.c.b16 %v2158, %v2158
        %v2175 = vpack.c.b16 %v2159, %v2159
        %v2176 = vpack.c.b16 %v2160, %v2160
        %v2177 = vpack.c.b16 %v2161, %v2161
        %v2178 = vpack.c.b16 %v2162, %v2162
        %v2179 = vpack.c.b16 %v2163, %v2163
        %v2180 = vpack.c.b16 %v2164, %v2164
        %v2181 = vpack.c.b16 %v2165, %v2165
        %v2182 = vpack.c.b16 %v2166, %v2166
        %v2183 = vpack.c.b16 %v2167, %v2167
        %2200 = vst [vmem:[%s177] sm:$0xf] %v2168
        %2201 = vst [vmem:[%s177 + $0x4] sm:$0xf] %v2169
        %2202 = vst [vmem:[%s177 + $0x8] sm:$0xf] %v2170
        %2203 = vst [vmem:[%s177 + $0xc] sm:$0xf] %v2171
        %2204 = vst [vmem:[%s177 + $0x10] sm:$0xf] %v2172
        %2205 = vst [vmem:[%s177 + $0x14] sm:$0xf] %v2173
        %2206 = vst [vmem:[%s177 + $0x18] sm:$0xf] %v2174
        %2207 = vst [vmem:[%s177 + $0x1c] sm:$0xf] %v2175
        %2208 = vst [vmem:[%s177 + $0x20] sm:$0xf] %v2176
        %2209 = vst [vmem:[%s177 + $0x24] sm:$0xf] %v2177
        %2210 = vst [vmem:[%s177 + $0x28] sm:$0xf] %v2178
        %2211 = vst [vmem:[%s177 + $0x2c] sm:$0xf] %v2179
        %2212 = vst [vmem:[%s177 + $0x30] sm:$0xf] %v2180
        %2213 = vst [vmem:[%s177 + $0x34] sm:$0xf] %v2181
        %2214 = vst [vmem:[%s177 + $0x38] sm:$0xf] %v2182
        %2215 = vst [vmem:[%s177 + $0x3c] sm:$0xf] %v2183
        %s2216 = sand.u32 %s107, 1
        %s2217 = scalar_lea.sflag [#allocation4], %s2216
        %s2218 = sand.u32 %s107, 1
        %s2219 = smul.addr %s2218, 64
        %s2220 = scalar_lea.vmem [#allocation3], %s2219
        // Predicated region
        $region33: #{tpu_custom_call.1} parent=31 // pred_check
          %p2221 = pneg %p117
        $region34: #{tpu_custom_call.1} parent=31 // pred_check_branch
          %2223 = sbr.rel (%p2221) target = $region36
        $region35: #{tpu_custom_call.1} parent=31 // pred_region
          %s2224 = smul.u32 8, %s22
          %s2226 = ssub.s32 1024, 1024
          %2227 = vsyncadd %s2217, %s2226
          %s2228 = smul.addr %s2224, 2
          %s2229 = smul.addr %s21, 32
          %s2230 = sadd.s32 %s2228, %s2229
          %s2231 = smul.addr %s2230, 64
          %s2232 = scalar_lea.hbm %s3, %s2231
          %s2233 = sshll.u32 %s2220, 4
          %s2234 = int_to_ptr.vmem [resolvable:$true] %s2233
          %2239 = dma.vmem_to_hbm [thread:$0]  %s2234, 1024, %s2232, %s2217, 64, 64, 4
        $region36: #{tpu_custom_call.1} parent=31 // pred_fallthru
          _
      $region32: #{tpu_custom_call.1} parent=5 // pred_fallthru
        _
      %p2240 = scmp.le.s32.totalorder 2, %s12
      // Predicated region
      $region37: #{tpu_custom_call.1} parent=5 // pred_check
        %p2241 = pneg %p2240
      $region38: #{tpu_custom_call.1} parent=5 // pred_check_branch
        %2243 = sbr.rel (%p2241) target = $region40
      $region39: #{tpu_custom_call.1} parent=5 // pred_region
        %s2244 = ssub.s32 %s12, 2
        // Predicated region
        $region41: #{tpu_custom_call.1} parent=39 // pred_check
          %p2245 = pneg %p123
        $region42: #{tpu_custom_call.1} parent=39 // pred_check_branch
          %2247 = sbr.rel (%p2245) target = $region44
        $region43: #{tpu_custom_call.1} parent=39 // pred_region
          %s2248 = sand.u32 %s108, 1
          %s2249 = scalar_lea.sflag [#allocation4], %s2248
          %s2250 = sand.u32 %s108, 1
          %s2251 = smul.addr %s2250, 64
          %s2252 = scalar_lea.vmem [#allocation3], %s2251
          %2253 = dma.done %s2249, 1024
        $region44: #{tpu_custom_call.1} parent=39 // pred_fallthru
          _
      $region40: #{tpu_custom_call.1} parent=5 // pred_fallthru
        _
    $region6: #{tpu_custom_call.1} parent=1 // loop_footer
      %s16 = sadd.s32 1, %s12
    $region7: #{tpu_custom_call.1} parent=1 // loop_footer_branch
      %11 = sbr.rel target = $region3
    $region8: #{tpu_custom_call.1} parent=1 // loop_exit
      _
    %2254 = vsyncpa [#allocation4], 1
    %s2255 = scalar_lea.sflag [#allocation4], 1
    %2256 = vsyncpa %s2255, 1

</llo_original>
